<compile_context>
chip_gen: v7x
topology: tpu7x:2x2x1
jax: 0.10.0
libtpu: 0.0.40
codegen_flags: <defaults>
</compile_context>

<pallas_src>
import functools

import jax
import jax.numpy as jnp
import numpy as np
from jax.experimental import pallas as pl
from jax.experimental.pallas import tpu as pltpu  # noqa: F401  (no grid/scratch needed at these shapes)


# ----------------------------------------------------------------------------
# Fused kernel: L LSTM layers (time-major, unrolled T) + Conv1d-over-batch +
# Linear.  All operands fit comfortably in VMEM, so a single invocation with
# whole-array refs is used (no grid, no pipelining overhead).
# ----------------------------------------------------------------------------
def _fused_lstm_cnn_kernel(*refs, T, H, K, P, L):
    x_ref = refs[0]                                  # (T, B, D) time-major
    lstm_refs = refs[1:1 + 2 * L]                    # per layer: w_stack, bias
    wconv_ref, bconv_ref, wlin_ref, blin_ref, out_ref = refs[1 + 2 * L:]

    B = x_ref.shape[1]

    # Current sequence as a Python list of (B, d) values (T is static).
    seq = [x_ref[t] for t in range(T)]

    for layer in range(L):
        w = lstm_refs[2 * layer][...]                # (d_in + H, 4H) stacked
        b = lstm_refs[2 * layer + 1][...]            # (1, 4H) = b_ih + b_hh
        h = jnp.zeros((B, H), jnp.float32)
        c = jnp.zeros((B, H), jnp.float32)
        outs = []
        for t in range(T):                           # fully unrolled
            xh = jnp.concatenate([seq[t], h], axis=1)            # (B, d_in+H)
            gates = jnp.dot(xh, w,
                            preferred_element_type=jnp.float32) + b  # (B, 4H)

            # One sigmoid over the whole packed vreg; fix up the g-gate lanes
            # with tanh(x) = 2*sigmoid(2x) - 1.  Gate order (PyTorch): i,f,g,o.
            lane = jax.lax.broadcasted_iota(jnp.int32, gates.shape, 1)
            g_mask = (lane >= 2 * H) & (lane < 3 * H)
            s = jax.nn.sigmoid(jnp.where(g_mask, 2.0 * gates, gates))
            acts = jnp.where(g_mask, 2.0 * s - 1.0, s)

            i_g = acts[:, 0 * H:1 * H]
            f_g = acts[:, 1 * H:2 * H]
            g_g = acts[:, 2 * H:3 * H]
            o_g = acts[:, 3 * H:4 * H]

            c = f_g * c + i_g * g_g
            h = o_g * jnp.tanh(c)
            outs.append(h)
        seq = outs

    # ---- Head: Conv1d over the batch axis (channels = H), then Linear ------
    h_last = seq[T - 1]                              # (B, H) == out[:, -1, :]
    if P > 0:
        zpad = jnp.zeros((P, H), jnp.float32)
        xpad = jnp.concatenate([zpad, h_last, zpad], axis=0)      # (B+2P, H)
    else:
        xpad = h_last
    B_out = B + 2 * P - K + 1
    # Single K*H-contraction matmul instead of K tiny ones.
    xstack = jnp.concatenate([xpad[k:k + B_out, :] for k in range(K)], axis=1)
    y = jnp.dot(xstack, wconv_ref[...],
                preferred_element_type=jnp.float32) + bconv_ref[...]  # (B_out, H)
    out = jnp.dot(y, wlin_ref[...],
                  preferred_element_type=jnp.float32) + blin_ref[...]  # (B_out, O)
    out_ref[...] = out.astype(out_ref.dtype)


# ----------------------------------------------------------------------------
# Wrapper: layout prep (glue) + single pallas_call.
# Params are in raw PyTorch layout:
#   lstm: list of (w_ih (4H,d_in), w_hh (4H,H), b_ih (4H,), b_hh (4H,))
#   w_conv: (H, H, K), b_conv: (H,), w_lin: (O, H), b_lin: (O,)
# ----------------------------------------------------------------------------
def lstm_cnn_forward(x_btd, params, *, kernel_size, padding):
    B, T, D = x_btd.shape
    L = len(params["lstm"])
    H = params["lstm"][0][1].shape[1]
    O = params["w_lin"].shape[0]
    K, P = kernel_size, padding
    B_out = B + 2 * P - K + 1

    # batch_first (B, T, D) -> time-major (T, B, D)
    x_tbd = jnp.transpose(x_btd, (1, 0, 2)).astype(jnp.float32)

    args = [x_tbd]
    for (w_ih, w_hh, b_ih, b_hh) in params["lstm"]:
        # Stack so one matmul does both input and recurrent projections.
        w_stack = jnp.concatenate([w_ih.T, w_hh.T], axis=0)       # (d_in+H, 4H)
        bias = (b_ih + b_hh).reshape(1, -1)                       # (1, 4H)
        args += [w_stack, bias]

    # (K, H_in, H_out) -> (K*H_in, H_out) so xstack @ wconv == Conv1d.
    wconv_stacked = jnp.transpose(params["w_conv"], (2, 1, 0)).reshape(K * H, H)
    args += [wconv_stacked,
             params["b_conv"].reshape(1, H),
             params["w_lin"].T,                                   # (H, O)
             params["b_lin"].reshape(1, O)]

    kernel = functools.partial(_fused_lstm_cnn_kernel, T=T, H=H, K=K, P=P, L=L)
    return pl.pallas_call(
        kernel,
        out_shape=jax.ShapeDtypeStruct((B_out, O), jnp.float32),
    )(*args)


# ----------------------------------------------------------------------------
# Pure-JAX reference (for correctness check).
# ----------------------------------------------------------------------------
def reference_forward(x_btd, params, *, kernel_size, padding):
    h = jnp.transpose(x_btd, (1, 0, 2))  # (T, B, D)
    for (w_ih, w_hh, b_ih, b_hh) in params["lstm"]:
        T, B, _ = h.shape
        H = w_hh.shape[1]
        wih_t, whh_t = w_ih.T, w_hh.T
        b = (b_ih + b_hh).reshape(1, -1)

        def step(carry, x_t, wih_t=wih_t, whh_t=whh_t, b=b, H=H):
            hh, cc = carry
            gates = x_t @ wih_t + hh @ whh_t + b
            i = jax.nn.sigmoid(gates[:, :H])
            f = jax.nn.sigmoid(gates[:, H:2 * H])
            g = jnp.tanh(gates[:, 2 * H:3 * H])
            o = jax.nn.sigmoid(gates[:, 3 * H:])
            cc = f * cc + i * g
            hh = o * jnp.tanh(cc)
            return (hh, cc), hh

        zero = jnp.zeros((B, H), jnp.float32)
        _, h = jax.lax.scan(step, (zero, zero), h)
    h_last = h[-1]                                   # (B, H)
    # Conv1d in PyTorch layout: (1, H, B), channels-first over length B.
    x = h_last.T                                     # (H, B)
    P, K = padding, kernel_size
    xpad = jnp.pad(x, ((0, 0), (P, P)))              # (H, B+2P)
    B = h_last.shape[0]
    B_out = B + 2 * P - K + 1
    y = params["b_conv"][:, None] + sum(
        params["w_conv"][:, :, k] @ xpad[:, k:k + B_out] for k in range(K))
    y = y.T                                          # (B_out, H)
    return y @ params["w_lin"].T + params["b_lin"]


# ----------------------------------------------------------------------------
if __name__ == "__main__":
    # Small shapes consistent with the module.
    B, T, D = 8, 8, 16          # batch, seq, input_size
    H, L, O = 32, 2, 8          # lstm_hidden_size, lstm_layers, lstm_output_size
    K, P = 3, 1                 # kernel_size, padding (keeps "length" == B)

    key = jax.random.PRNGKey(0)
    keys = jax.random.split(key, 4 * L + 6)
    s = 1.0 / np.sqrt(H)

    lstm_params = []
    kidx = 0
    for layer in range(L):
        d_in = D if layer == 0 else H
        w_ih = jax.random.uniform(keys[kidx], (4 * H, d_in), jnp.float32, -s, s); kidx += 1
        w_hh = jax.random.uniform(keys[kidx], (4 * H, H), jnp.float32, -s, s);    kidx += 1
        b_ih = jax.random.uniform(keys[kidx], (4 * H,), jnp.float32, -s, s);      kidx += 1
        b_hh = jax.random.uniform(keys[kidx], (4 * H,), jnp.float32, -s, s);      kidx += 1
        lstm_params.append((w_ih, w_hh, b_ih, b_hh))

    sc = 1.0 / np.sqrt(H * K)
    w_conv = jax.random.uniform(keys[kidx], (H, H, K), jnp.float32, -sc, sc); kidx += 1
    b_conv = jax.random.uniform(keys[kidx], (H,), jnp.float32, -sc, sc);      kidx += 1
    sl = 1.0 / np.sqrt(H)
    w_lin = jax.random.uniform(keys[kidx], (O, H), jnp.float32, -sl, sl);     kidx += 1
    b_lin = jax.random.uniform(keys[kidx], (O,), jnp.float32, -sl, sl);       kidx += 1

    params = {"lstm": lstm_params, "w_conv": w_conv, "b_conv": b_conv,
              "w_lin": w_lin, "b_lin": b_lin}

    x = jax.random.normal(keys[kidx], (B, T, D), jnp.float32)

    out = lstm_cnn_forward(x, params, kernel_size=K, padding=P)
    out = jax.block_until_ready(out)

    ref = jax.block_until_ready(
        reference_forward(x, params, kernel_size=K, padding=P))

    assert out.shape == (B, O), out.shape
    np.testing.assert_allclose(np.asarray(out), np.asarray(ref),
                               rtol=2e-2, atol=2e-2)
    print("KERNEL_OK")
</pallas_src>

<mosaic_0001>
module attributes {stable_mosaic.version = 11 : i64} {
  func.func @_fused_lstm_cnn_kernel(%arg0: memref<8x8x16xf32, #tpu.memory_space<vmem>>, %arg1: memref<48x128xf32, #tpu.memory_space<vmem>>, %arg2: memref<1x128xf32, #tpu.memory_space<vmem>>, %arg3: memref<64x128xf32, #tpu.memory_space<vmem>>, %arg4: memref<1x128xf32, #tpu.memory_space<vmem>>, %arg5: memref<96x32xf32, #tpu.memory_space<vmem>>, %arg6: memref<1x32xf32, #tpu.memory_space<vmem>>, %arg7: memref<32x8xf32, #tpu.memory_space<vmem>>, %arg8: memref<1x8xf32, #tpu.memory_space<vmem>>, %arg9: memref<8x8xf32, #tpu.memory_space<vmem>>) attributes {dimension_semantics = [], scalar_prefetch = 0 : i64, scratch_operands = 0 : i64, tpu.core_type = #tpu.core_type<tc>} {
    %c0 = arith.constant 0 : index
    %c0_0 = arith.constant 0 : index
    %c0_1 = arith.constant 0 : index
    %0 = vector.load %arg0[%c0, %c0_0, %c0_1] : memref<8x8x16xf32, #tpu.memory_space<vmem>>, vector<1x8x16xf32>
    %1 = vector.shape_cast %0 : vector<1x8x16xf32> to vector<8x16xf32>
    %c1 = arith.constant 1 : index
    %c0_2 = arith.constant 0 : index
    %c0_3 = arith.constant 0 : index
    %2 = vector.load %arg0[%c1, %c0_2, %c0_3] : memref<8x8x16xf32, #tpu.memory_space<vmem>>, vector<1x8x16xf32>
    %3 = vector.shape_cast %2 : vector<1x8x16xf32> to vector<8x16xf32>
    %c2 = arith.constant 2 : index
    %c0_4 = arith.constant 0 : index
    %c0_5 = arith.constant 0 : index
    %4 = vector.load %arg0[%c2, %c0_4, %c0_5] : memref<8x8x16xf32, #tpu.memory_space<vmem>>, vector<1x8x16xf32>
    %5 = vector.shape_cast %4 : vector<1x8x16xf32> to vector<8x16xf32>
    %c3 = arith.constant 3 : index
    %c0_6 = arith.constant 0 : index
    %c0_7 = arith.constant 0 : index
    %6 = vector.load %arg0[%c3, %c0_6, %c0_7] : memref<8x8x16xf32, #tpu.memory_space<vmem>>, vector<1x8x16xf32>
    %7 = vector.shape_cast %6 : vector<1x8x16xf32> to vector<8x16xf32>
    %c4 = arith.constant 4 : index
    %c0_8 = arith.constant 0 : index
    %c0_9 = arith.constant 0 : index
    %8 = vector.load %arg0[%c4, %c0_8, %c0_9] : memref<8x8x16xf32, #tpu.memory_space<vmem>>, vector<1x8x16xf32>
    %9 = vector.shape_cast %8 : vector<1x8x16xf32> to vector<8x16xf32>
    %c5 = arith.constant 5 : index
    %c0_10 = arith.constant 0 : index
    %c0_11 = arith.constant 0 : index
    %10 = vector.load %arg0[%c5, %c0_10, %c0_11] : memref<8x8x16xf32, #tpu.memory_space<vmem>>, vector<1x8x16xf32>
    %11 = vector.shape_cast %10 : vector<1x8x16xf32> to vector<8x16xf32>
    %c6 = arith.constant 6 : index
    %c0_12 = arith.constant 0 : index
    %c0_13 = arith.constant 0 : index
    %12 = vector.load %arg0[%c6, %c0_12, %c0_13] : memref<8x8x16xf32, #tpu.memory_space<vmem>>, vector<1x8x16xf32>
    %13 = vector.shape_cast %12 : vector<1x8x16xf32> to vector<8x16xf32>
    %c7 = arith.constant 7 : index
    %c0_14 = arith.constant 0 : index
    %c0_15 = arith.constant 0 : index
    %14 = vector.load %arg0[%c7, %c0_14, %c0_15] : memref<8x8x16xf32, #tpu.memory_space<vmem>>, vector<1x8x16xf32>
    %15 = vector.shape_cast %14 : vector<1x8x16xf32> to vector<8x16xf32>
    %c0_16 = arith.constant 0 : index
    %c0_17 = arith.constant 0 : index
    %16 = vector.load %arg1[%c0_16, %c0_17] : memref<48x128xf32, #tpu.memory_space<vmem>>, vector<48x128xf32>
    %c0_18 = arith.constant 0 : index
    %c0_19 = arith.constant 0 : index
    %17 = vector.load %arg2[%c0_18, %c0_19] : memref<1x128xf32, #tpu.memory_space<vmem>>, vector<1x128xf32>
    %cst = arith.constant 0.000000e+00 : f32
    %18 = vector.broadcast %cst : f32 to vector<8x32xf32>
    %cst_20 = arith.constant 0.000000e+00 : f32
    %19 = vector.broadcast %cst_20 : f32 to vector<8x32xf32>
    %20 = tpu.concatenate %1, %18 in 1 : vector<8x16xf32>, vector<8x32xf32> -> vector<8x48xf32>
    %cst_21 = arith.constant dense<0.000000e+00> : vector<8x128xf32>
    %21 = tpu.matmul %20, %16, %cst_21 {dimension_numbers = #tpu.dot_dimension_numbers<[1], [0], [0], [1], [0, 0, 1, 1], [], []>} : vector<8x48xf32>, vector<48x128xf32>, vector<8x128xf32> -> vector<8x128xf32>
    %22 = vector.broadcast %17 : vector<1x128xf32> to vector<8x128xf32>
    %23 = arith.addf %21, %22 : vector<8x128xf32>
    %24 = tpu.iota {dimensions = array<i32: 1>} : vector<8x128xi32>
    %c64_i32 = arith.constant 64 : i32
    %25 = vector.broadcast %c64_i32 : i32 to vector<8x128xi32>
    %26 = arith.cmpi sge, %24, %25 : vector<8x128xi32>
    %c96_i32 = arith.constant 96 : i32
    %27 = vector.broadcast %c96_i32 : i32 to vector<8x128xi32>
    %28 = arith.cmpi slt, %24, %27 : vector<8x128xi32>
    %29 = arith.andi %26, %28 : vector<8x128xi1>
    %cst_22 = arith.constant 2.000000e+00 : f32
    %30 = vector.broadcast %cst_22 : f32 to vector<8x128xf32>
    %31 = arith.mulf %30, %23 : vector<8x128xf32>
    %32 = arith.select %29, %31, %23 : vector<8x128xi1>, vector<8x128xf32>
    %33 = arith.negf %32 : vector<8x128xf32>
    %34 = math.exp %33 : vector<8x128xf32>
    %cst_23 = arith.constant 1.000000e+00 : f32
    %35 = vector.broadcast %cst_23 : f32 to vector<8x128xf32>
    %36 = arith.addf %35, %34 : vector<8x128xf32>
    %37 = arith.divf %35, %36 : vector<8x128xf32>
    %cst_24 = arith.constant 2.000000e+00 : f32
    %38 = vector.broadcast %cst_24 : f32 to vector<8x128xf32>
    %39 = arith.mulf %38, %37 : vector<8x128xf32>
    %cst_25 = arith.constant 1.000000e+00 : f32
    %40 = vector.broadcast %cst_25 : f32 to vector<8x128xf32>
    %41 = arith.subf %39, %40 : vector<8x128xf32>
    %42 = arith.select %29, %41, %37 : vector<8x128xi1>, vector<8x128xf32>
    %43 = vector.extract_strided_slice %42 {offsets = [0, 0], sizes = [8, 32], strides = [1, 1]} : vector<8x128xf32> to vector<8x32xf32>
    %44 = vector.extract_strided_slice %42 {offsets = [0, 32], sizes = [8, 32], strides = [1, 1]} : vector<8x128xf32> to vector<8x32xf32>
    %45 = vector.extract_strided_slice %42 {offsets = [0, 64], sizes = [8, 32], strides = [1, 1]} : vector<8x128xf32> to vector<8x32xf32>
    %46 = vector.extract_strided_slice %42 {offsets = [0, 96], sizes = [8, 32], strides = [1, 1]} : vector<8x128xf32> to vector<8x32xf32>
    %47 = arith.mulf %44, %19 : vector<8x32xf32>
    %48 = arith.mulf %43, %45 : vector<8x32xf32>
    %49 = arith.addf %47, %48 : vector<8x32xf32>
    %50 = math.tanh %49 : vector<8x32xf32>
    %51 = arith.mulf %46, %50 : vector<8x32xf32>
    %52 = tpu.concatenate %3, %51 in 1 : vector<8x16xf32>, vector<8x32xf32> -> vector<8x48xf32>
    %cst_26 = arith.constant dense<0.000000e+00> : vector<8x128xf32>
    %53 = tpu.matmul %52, %16, %cst_26 {dimension_numbers = #tpu.dot_dimension_numbers<[1], [0], [0], [1], [0, 0, 1, 1], [], []>} : vector<8x48xf32>, vector<48x128xf32>, vector<8x128xf32> -> vector<8x128xf32>
    %54 = vector.broadcast %17 : vector<1x128xf32> to vector<8x128xf32>
    %55 = arith.addf %53, %54 : vector<8x128xf32>
    %56 = tpu.iota {dimensions = array<i32: 1>} : vector<8x128xi32>
    %c64_i32_27 = arith.constant 64 : i32
    %57 = vector.broadcast %c64_i32_27 : i32 to vector<8x128xi32>
    %58 = arith.cmpi sge, %56, %57 : vector<8x128xi32>
    %c96_i32_28 = arith.constant 96 : i32
    %59 = vector.broadcast %c96_i32_28 : i32 to vector<8x128xi32>
    %60 = arith.cmpi slt, %56, %59 : vector<8x128xi32>
    %61 = arith.andi %58, %60 : vector<8x128xi1>
    %cst_29 = arith.constant 2.000000e+00 : f32
    %62 = vector.broadcast %cst_29 : f32 to vector<8x128xf32>
    %63 = arith.mulf %62, %55 : vector<8x128xf32>
    %64 = arith.select %61, %63, %55 : vector<8x128xi1>, vector<8x128xf32>
    %65 = arith.negf %64 : vector<8x128xf32>
    %66 = math.exp %65 : vector<8x128xf32>
    %cst_30 = arith.constant 1.000000e+00 : f32
    %67 = vector.broadcast %cst_30 : f32 to vector<8x128xf32>
    %68 = arith.addf %67, %66 : vector<8x128xf32>
    %69 = arith.divf %67, %68 : vector<8x128xf32>
    %cst_31 = arith.constant 2.000000e+00 : f32
    %70 = vector.broadcast %cst_31 : f32 to vector<8x128xf32>
    %71 = arith.mulf %70, %69 : vector<8x128xf32>
    %cst_32 = arith.constant 1.000000e+00 : f32
    %72 = vector.broadcast %cst_32 : f32 to vector<8x128xf32>
    %73 = arith.subf %71, %72 : vector<8x128xf32>
    %74 = arith.select %61, %73, %69 : vector<8x128xi1>, vector<8x128xf32>
    %75 = vector.extract_strided_slice %74 {offsets = [0, 0], sizes = [8, 32], strides = [1, 1]} : vector<8x128xf32> to vector<8x32xf32>
    %76 = vector.extract_strided_slice %74 {offsets = [0, 32], sizes = [8, 32], strides = [1, 1]} : vector<8x128xf32> to vector<8x32xf32>
    %77 = vector.extract_strided_slice %74 {offsets = [0, 64], sizes = [8, 32], strides = [1, 1]} : vector<8x128xf32> to vector<8x32xf32>
    %78 = vector.extract_strided_slice %74 {offsets = [0, 96], sizes = [8, 32], strides = [1, 1]} : vector<8x128xf32> to vector<8x32xf32>
    %79 = arith.mulf %76, %49 : vector<8x32xf32>
    %80 = arith.mulf %75, %77 : vector<8x32xf32>
    %81 = arith.addf %79, %80 : vector<8x32xf32>
    %82 = math.tanh %81 : vector<8x32xf32>
    %83 = arith.mulf %78, %82 : vector<8x32xf32>
    %84 = tpu.concatenate %5, %83 in 1 : vector<8x16xf32>, vector<8x32xf32> -> vector<8x48xf32>
    %cst_33 = arith.constant dense<0.000000e+00> : vector<8x128xf32>
    %85 = tpu.matmul %84, %16, %cst_33 {dimension_numbers = #tpu.dot_dimension_numbers<[1], [0], [0], [1], [0, 0, 1, 1], [], []>} : vector<8x48xf32>, vector<48x128xf32>, vector<8x128xf32> -> vector<8x128xf32>
    %86 = vector.broadcast %17 : vector<1x128xf32> to vector<8x128xf32>
    %87 = arith.addf %85, %86 : vector<8x128xf32>
    %88 = tpu.iota {dimensions = array<i32: 1>} : vector<8x128xi32>
    %c64_i32_34 = arith.constant 64 : i32
    %89 = vector.broadcast %c64_i32_34 : i32 to vector<8x128xi32>
    %90 = arith.cmpi sge, %88, %89 : vector<8x128xi32>
    %c96_i32_35 = arith.constant 96 : i32
    %91 = vector.broadcast %c96_i32_35 : i32 to vector<8x128xi32>
    %92 = arith.cmpi slt, %88, %91 : vector<8x128xi32>
    %93 = arith.andi %90, %92 : vector<8x128xi1>
    %cst_36 = arith.constant 2.000000e+00 : f32
    %94 = vector.broadcast %cst_36 : f32 to vector<8x128xf32>
    %95 = arith.mulf %94, %87 : vector<8x128xf32>
    %96 = arith.select %93, %95, %87 : vector<8x128xi1>, vector<8x128xf32>
    %97 = arith.negf %96 : vector<8x128xf32>
    %98 = math.exp %97 : vector<8x128xf32>
    %cst_37 = arith.constant 1.000000e+00 : f32
    %99 = vector.broadcast %cst_37 : f32 to vector<8x128xf32>
    %100 = arith.addf %99, %98 : vector<8x128xf32>
    %101 = arith.divf %99, %100 : vector<8x128xf32>
    %cst_38 = arith.constant 2.000000e+00 : f32
    %102 = vector.broadcast %cst_38 : f32 to vector<8x128xf32>
    %103 = arith.mulf %102, %101 : vector<8x128xf32>
    %cst_39 = arith.constant 1.000000e+00 : f32
    %104 = vector.broadcast %cst_39 : f32 to vector<8x128xf32>
    %105 = arith.subf %103, %104 : vector<8x128xf32>
    %106 = arith.select %93, %105, %101 : vector<8x128xi1>, vector<8x128xf32>
    %107 = vector.extract_strided_slice %106 {offsets = [0, 0], sizes = [8, 32], strides = [1, 1]} : vector<8x128xf32> to vector<8x32xf32>
    %108 = vector.extract_strided_slice %106 {offsets = [0, 32], sizes = [8, 32], strides = [1, 1]} : vector<8x128xf32> to vector<8x32xf32>
    %109 = vector.extract_strided_slice %106 {offsets = [0, 64], sizes = [8, 32], strides = [1, 1]} : vector<8x128xf32> to vector<8x32xf32>
    %110 = vector.extract_strided_slice %106 {offsets = [0, 96], sizes = [8, 32], strides = [1, 1]} : vector<8x128xf32> to vector<8x32xf32>
    %111 = arith.mulf %108, %81 : vector<8x32xf32>
    %112 = arith.mulf %107, %109 : vector<8x32xf32>
    %113 = arith.addf %111, %112 : vector<8x32xf32>
    %114 = math.tanh %113 : vector<8x32xf32>
    %115 = arith.mulf %110, %114 : vector<8x32xf32>
    %116 = tpu.concatenate %7, %115 in 1 : vector<8x16xf32>, vector<8x32xf32> -> vector<8x48xf32>
    %cst_40 = arith.constant dense<0.000000e+00> : vector<8x128xf32>
    %117 = tpu.matmul %116, %16, %cst_40 {dimension_numbers = #tpu.dot_dimension_numbers<[1], [0], [0], [1], [0, 0, 1, 1], [], []>} : vector<8x48xf32>, vector<48x128xf32>, vector<8x128xf32> -> vector<8x128xf32>
    %118 = vector.broadcast %17 : vector<1x128xf32> to vector<8x128xf32>
    %119 = arith.addf %117, %118 : vector<8x128xf32>
    %120 = tpu.iota {dimensions = array<i32: 1>} : vector<8x128xi32>
    %c64_i32_41 = arith.constant 64 : i32
    %121 = vector.broadcast %c64_i32_41 : i32 to vector<8x128xi32>
    %122 = arith.cmpi sge, %120, %121 : vector<8x128xi32>
    %c96_i32_42 = arith.constant 96 : i32
    %123 = vector.broadcast %c96_i32_42 : i32 to vector<8x128xi32>
    %124 = arith.cmpi slt, %120, %123 : vector<8x128xi32>
    %125 = arith.andi %122, %124 : vector<8x128xi1>
    %cst_43 = arith.constant 2.000000e+00 : f32
    %126 = vector.broadcast %cst_43 : f32 to vector<8x128xf32>
    %127 = arith.mulf %126, %119 : vector<8x128xf32>
    %128 = arith.select %125, %127, %119 : vector<8x128xi1>, vector<8x128xf32>
    %129 = arith.negf %128 : vector<8x128xf32>
    %130 = math.exp %129 : vector<8x128xf32>
    %cst_44 = arith.constant 1.000000e+00 : f32
    %131 = vector.broadcast %cst_44 : f32 to vector<8x128xf32>
    %132 = arith.addf %131, %130 : vector<8x128xf32>
    %133 = arith.divf %131, %132 : vector<8x128xf32>
    %cst_45 = arith.constant 2.000000e+00 : f32
    %134 = vector.broadcast %cst_45 : f32 to vector<8x128xf32>
    %135 = arith.mulf %134, %133 : vector<8x128xf32>
    %cst_46 = arith.constant 1.000000e+00 : f32
    %136 = vector.broadcast %cst_46 : f32 to vector<8x128xf32>
    %137 = arith.subf %135, %136 : vector<8x128xf32>
    %138 = arith.select %125, %137, %133 : vector<8x128xi1>, vector<8x128xf32>
    %139 = vector.extract_strided_slice %138 {offsets = [0, 0], sizes = [8, 32], strides = [1, 1]} : vector<8x128xf32> to vector<8x32xf32>
    %140 = vector.extract_strided_slice %138 {offsets = [0, 32], sizes = [8, 32], strides = [1, 1]} : vector<8x128xf32> to vector<8x32xf32>
    %141 = vector.extract_strided_slice %138 {offsets = [0, 64], sizes = [8, 32], strides = [1, 1]} : vector<8x128xf32> to vector<8x32xf32>
    %142 = vector.extract_strided_slice %138 {offsets = [0, 96], sizes = [8, 32], strides = [1, 1]} : vector<8x128xf32> to vector<8x32xf32>
    %143 = arith.mulf %140, %113 : vector<8x32xf32>
    %144 = arith.mulf %139, %141 : vector<8x32xf32>
    %145 = arith.addf %143, %144 : vector<8x32xf32>
    %146 = math.tanh %145 : vector<8x32xf32>
    %147 = arith.mulf %142, %146 : vector<8x32xf32>
    %148 = tpu.concatenate %9, %147 in 1 : vector<8x16xf32>, vector<8x32xf32> -> vector<8x48xf32>
    %cst_47 = arith.constant dense<0.000000e+00> : vector<8x128xf32>
    %149 = tpu.matmul %148, %16, %cst_47 {dimension_numbers = #tpu.dot_dimension_numbers<[1], [0], [0], [1], [0, 0, 1, 1], [], []>} : vector<8x48xf32>, vector<48x128xf32>, vector<8x128xf32> -> vector<8x128xf32>
    %150 = vector.broadcast %17 : vector<1x128xf32> to vector<8x128xf32>
    %151 = arith.addf %149, %150 : vector<8x128xf32>
    %152 = tpu.iota {dimensions = array<i32: 1>} : vector<8x128xi32>
    %c64_i32_48 = arith.constant 64 : i32
    %153 = vector.broadcast %c64_i32_48 : i32 to vector<8x128xi32>
    %154 = arith.cmpi sge, %152, %153 : vector<8x128xi32>
    %c96_i32_49 = arith.constant 96 : i32
    %155 = vector.broadcast %c96_i32_49 : i32 to vector<8x128xi32>
    %156 = arith.cmpi slt, %152, %155 : vector<8x128xi32>
    %157 = arith.andi %154, %156 : vector<8x128xi1>
    %cst_50 = arith.constant 2.000000e+00 : f32
    %158 = vector.broadcast %cst_50 : f32 to vector<8x128xf32>
    %159 = arith.mulf %158, %151 : vector<8x128xf32>
    %160 = arith.select %157, %159, %151 : vector<8x128xi1>, vector<8x128xf32>
    %161 = arith.negf %160 : vector<8x128xf32>
    %162 = math.exp %161 : vector<8x128xf32>
    %cst_51 = arith.constant 1.000000e+00 : f32
    %163 = vector.broadcast %cst_51 : f32 to vector<8x128xf32>
    %164 = arith.addf %163, %162 : vector<8x128xf32>
    %165 = arith.divf %163, %164 : vector<8x128xf32>
    %cst_52 = arith.constant 2.000000e+00 : f32
    %166 = vector.broadcast %cst_52 : f32 to vector<8x128xf32>
    %167 = arith.mulf %166, %165 : vector<8x128xf32>
    %cst_53 = arith.constant 1.000000e+00 : f32
    %168 = vector.broadcast %cst_53 : f32 to vector<8x128xf32>
    %169 = arith.subf %167, %168 : vector<8x128xf32>
    %170 = arith.select %157, %169, %165 : vector<8x128xi1>, vector<8x128xf32>
    %171 = vector.extract_strided_slice %170 {offsets = [0, 0], sizes = [8, 32], strides = [1, 1]} : vector<8x128xf32> to vector<8x32xf32>
    %172 = vector.extract_strided_slice %170 {offsets = [0, 32], sizes = [8, 32], strides = [1, 1]} : vector<8x128xf32> to vector<8x32xf32>
    %173 = vector.extract_strided_slice %170 {offsets = [0, 64], sizes = [8, 32], strides = [1, 1]} : vector<8x128xf32> to vector<8x32xf32>
    %174 = vector.extract_strided_slice %170 {offsets = [0, 96], sizes = [8, 32], strides = [1, 1]} : vector<8x128xf32> to vector<8x32xf32>
    %175 = arith.mulf %172, %145 : vector<8x32xf32>
    %176 = arith.mulf %171, %173 : vector<8x32xf32>
    %177 = arith.addf %175, %176 : vector<8x32xf32>
    %178 = math.tanh %177 : vector<8x32xf32>
    %179 = arith.mulf %174, %178 : vector<8x32xf32>
    %180 = tpu.concatenate %11, %179 in 1 : vector<8x16xf32>, vector<8x32xf32> -> vector<8x48xf32>
    %cst_54 = arith.constant dense<0.000000e+00> : vector<8x128xf32>
    %181 = tpu.matmul %180, %16, %cst_54 {dimension_numbers = #tpu.dot_dimension_numbers<[1], [0], [0], [1], [0, 0, 1, 1], [], []>} : vector<8x48xf32>, vector<48x128xf32>, vector<8x128xf32> -> vector<8x128xf32>
    %182 = vector.broadcast %17 : vector<1x128xf32> to vector<8x128xf32>
    %183 = arith.addf %181, %182 : vector<8x128xf32>
    %184 = tpu.iota {dimensions = array<i32: 1>} : vector<8x128xi32>
    %c64_i32_55 = arith.constant 64 : i32
    %185 = vector.broadcast %c64_i32_55 : i32 to vector<8x128xi32>
    %186 = arith.cmpi sge, %184, %185 : vector<8x128xi32>
    %c96_i32_56 = arith.constant 96 : i32
    %187 = vector.broadcast %c96_i32_56 : i32 to vector<8x128xi32>
    %188 = arith.cmpi slt, %184, %187 : vector<8x128xi32>
    %189 = arith.andi %186, %188 : vector<8x128xi1>
    %cst_57 = arith.constant 2.000000e+00 : f32
    %190 = vector.broadcast %cst_57 : f32 to vector<8x128xf32>
    %191 = arith.mulf %190, %183 : vector<8x128xf32>
    %192 = arith.select %189, %191, %183 : vector<8x128xi1>, vector<8x128xf32>
    %193 = arith.negf %192 : vector<8x128xf32>
    %194 = math.exp %193 : vector<8x128xf32>
    %cst_58 = arith.constant 1.000000e+00 : f32
    %195 = vector.broadcast %cst_58 : f32 to vector<8x128xf32>
    %196 = arith.addf %195, %194 : vector<8x128xf32>
    %197 = arith.divf %195, %196 : vector<8x128xf32>
    %cst_59 = arith.constant 2.000000e+00 : f32
    %198 = vector.broadcast %cst_59 : f32 to vector<8x128xf32>
    %199 = arith.mulf %198, %197 : vector<8x128xf32>
    %cst_60 = arith.constant 1.000000e+00 : f32
    %200 = vector.broadcast %cst_60 : f32 to vector<8x128xf32>
    %201 = arith.subf %199, %200 : vector<8x128xf32>
    %202 = arith.select %189, %201, %197 : vector<8x128xi1>, vector<8x128xf32>
    %203 = vector.extract_strided_slice %202 {offsets = [0, 0], sizes = [8, 32], strides = [1, 1]} : vector<8x128xf32> to vector<8x32xf32>
    %204 = vector.extract_strided_slice %202 {offsets = [0, 32], sizes = [8, 32], strides = [1, 1]} : vector<8x128xf32> to vector<8x32xf32>
    %205 = vector.extract_strided_slice %202 {offsets = [0, 64], sizes = [8, 32], strides = [1, 1]} : vector<8x128xf32> to vector<8x32xf32>
    %206 = vector.extract_strided_slice %202 {offsets = [0, 96], sizes = [8, 32], strides = [1, 1]} : vector<8x128xf32> to vector<8x32xf32>
    %207 = arith.mulf %204, %177 : vector<8x32xf32>
    %208 = arith.mulf %203, %205 : vector<8x32xf32>
    %209 = arith.addf %207, %208 : vector<8x32xf32>
    %210 = math.tanh %209 : vector<8x32xf32>
    %211 = arith.mulf %206, %210 : vector<8x32xf32>
    %212 = tpu.concatenate %13, %211 in 1 : vector<8x16xf32>, vector<8x32xf32> -> vector<8x48xf32>
    %cst_61 = arith.constant dense<0.000000e+00> : vector<8x128xf32>
    %213 = tpu.matmul %212, %16, %cst_61 {dimension_numbers = #tpu.dot_dimension_numbers<[1], [0], [0], [1], [0, 0, 1, 1], [], []>} : vector<8x48xf32>, vector<48x128xf32>, vector<8x128xf32> -> vector<8x128xf32>
    %214 = vector.broadcast %17 : vector<1x128xf32> to vector<8x128xf32>
    %215 = arith.addf %213, %214 : vector<8x128xf32>
    %216 = tpu.iota {dimensions = array<i32: 1>} : vector<8x128xi32>
    %c64_i32_62 = arith.constant 64 : i32
    %217 = vector.broadcast %c64_i32_62 : i32 to vector<8x128xi32>
    %218 = arith.cmpi sge, %216, %217 : vector<8x128xi32>
    %c96_i32_63 = arith.constant 96 : i32
    %219 = vector.broadcast %c96_i32_63 : i32 to vector<8x128xi32>
    %220 = arith.cmpi slt, %216, %219 : vector<8x128xi32>
    %221 = arith.andi %218, %220 : vector<8x128xi1>
    %cst_64 = arith.constant 2.000000e+00 : f32
    %222 = vector.broadcast %cst_64 : f32 to vector<8x128xf32>
    %223 = arith.mulf %222, %215 : vector<8x128xf32>
    %224 = arith.select %221, %223, %215 : vector<8x128xi1>, vector<8x128xf32>
    %225 = arith.negf %224 : vector<8x128xf32>
    %226 = math.exp %225 : vector<8x128xf32>
    %cst_65 = arith.constant 1.000000e+00 : f32
    %227 = vector.broadcast %cst_65 : f32 to vector<8x128xf32>
    %228 = arith.addf %227, %226 : vector<8x128xf32>
    %229 = arith.divf %227, %228 : vector<8x128xf32>
    %cst_66 = arith.constant 2.000000e+00 : f32
    %230 = vector.broadcast %cst_66 : f32 to vector<8x128xf32>
    %231 = arith.mulf %230, %229 : vector<8x128xf32>
    %cst_67 = arith.constant 1.000000e+00 : f32
    %232 = vector.broadcast %cst_67 : f32 to vector<8x128xf32>
    %233 = arith.subf %231, %232 : vector<8x128xf32>
    %234 = arith.select %221, %233, %229 : vector<8x128xi1>, vector<8x128xf32>
    %235 = vector.extract_strided_slice %234 {offsets = [0, 0], sizes = [8, 32], strides = [1, 1]} : vector<8x128xf32> to vector<8x32xf32>
    %236 = vector.extract_strided_slice %234 {offsets = [0, 32], sizes = [8, 32], strides = [1, 1]} : vector<8x128xf32> to vector<8x32xf32>
    %237 = vector.extract_strided_slice %234 {offsets = [0, 64], sizes = [8, 32], strides = [1, 1]} : vector<8x128xf32> to vector<8x32xf32>
    %238 = vector.extract_strided_slice %234 {offsets = [0, 96], sizes = [8, 32], strides = [1, 1]} : vector<8x128xf32> to vector<8x32xf32>
    %239 = arith.mulf %236, %209 : vector<8x32xf32>
    %240 = arith.mulf %235, %237 : vector<8x32xf32>
    %241 = arith.addf %239, %240 : vector<8x32xf32>
    %242 = math.tanh %241 : vector<8x32xf32>
    %243 = arith.mulf %238, %242 : vector<8x32xf32>
    %244 = tpu.concatenate %15, %243 in 1 : vector<8x16xf32>, vector<8x32xf32> -> vector<8x48xf32>
    %cst_68 = arith.constant dense<0.000000e+00> : vector<8x128xf32>
    %245 = tpu.matmul %244, %16, %cst_68 {dimension_numbers = #tpu.dot_dimension_numbers<[1], [0], [0], [1], [0, 0, 1, 1], [], []>} : vector<8x48xf32>, vector<48x128xf32>, vector<8x128xf32> -> vector<8x128xf32>
    %246 = vector.broadcast %17 : vector<1x128xf32> to vector<8x128xf32>
    %247 = arith.addf %245, %246 : vector<8x128xf32>
    %248 = tpu.iota {dimensions = array<i32: 1>} : vector<8x128xi32>
    %c64_i32_69 = arith.constant 64 : i32
    %249 = vector.broadcast %c64_i32_69 : i32 to vector<8x128xi32>
    %250 = arith.cmpi sge, %248, %249 : vector<8x128xi32>
    %c96_i32_70 = arith.constant 96 : i32
    %251 = vector.broadcast %c96_i32_70 : i32 to vector<8x128xi32>
    %252 = arith.cmpi slt, %248, %251 : vector<8x128xi32>
    %253 = arith.andi %250, %252 : vector<8x128xi1>
    %cst_71 = arith.constant 2.000000e+00 : f32
    %254 = vector.broadcast %cst_71 : f32 to vector<8x128xf32>
    %255 = arith.mulf %254, %247 : vector<8x128xf32>
    %256 = arith.select %253, %255, %247 : vector<8x128xi1>, vector<8x128xf32>
    %257 = arith.negf %256 : vector<8x128xf32>
    %258 = math.exp %257 : vector<8x128xf32>
    %cst_72 = arith.constant 1.000000e+00 : f32
    %259 = vector.broadcast %cst_72 : f32 to vector<8x128xf32>
    %260 = arith.addf %259, %258 : vector<8x128xf32>
    %261 = arith.divf %259, %260 : vector<8x128xf32>
    %cst_73 = arith.constant 2.000000e+00 : f32
    %262 = vector.broadcast %cst_73 : f32 to vector<8x128xf32>
    %263 = arith.mulf %262, %261 : vector<8x128xf32>
    %cst_74 = arith.constant 1.000000e+00 : f32
    %264 = vector.broadcast %cst_74 : f32 to vector<8x128xf32>
    %265 = arith.subf %263, %264 : vector<8x128xf32>
    %266 = arith.select %253, %265, %261 : vector<8x128xi1>, vector<8x128xf32>
    %267 = vector.extract_strided_slice %266 {offsets = [0, 0], sizes = [8, 32], strides = [1, 1]} : vector<8x128xf32> to vector<8x32xf32>
    %268 = vector.extract_strided_slice %266 {offsets = [0, 32], sizes = [8, 32], strides = [1, 1]} : vector<8x128xf32> to vector<8x32xf32>
    %269 = vector.extract_strided_slice %266 {offsets = [0, 64], sizes = [8, 32], strides = [1, 1]} : vector<8x128xf32> to vector<8x32xf32>
    %270 = vector.extract_strided_slice %266 {offsets = [0, 96], sizes = [8, 32], strides = [1, 1]} : vector<8x128xf32> to vector<8x32xf32>
    %271 = arith.mulf %268, %241 : vector<8x32xf32>
    %272 = arith.mulf %267, %269 : vector<8x32xf32>
    %273 = arith.addf %271, %272 : vector<8x32xf32>
    %274 = math.tanh %273 : vector<8x32xf32>
    %275 = arith.mulf %270, %274 : vector<8x32xf32>
    %c0_75 = arith.constant 0 : index
    %c0_76 = arith.constant 0 : index
    %276 = vector.load %arg3[%c0_75, %c0_76] : memref<64x128xf32, #tpu.memory_space<vmem>>, vector<64x128xf32>
    %c0_77 = arith.constant 0 : index
    %c0_78 = arith.constant 0 : index
    %277 = vector.load %arg4[%c0_77, %c0_78] : memref<1x128xf32, #tpu.memory_space<vmem>>, vector<1x128xf32>
    %cst_79 = arith.constant 0.000000e+00 : f32
    %278 = vector.broadcast %cst_79 : f32 to vector<8x32xf32>
    %cst_80 = arith.constant 0.000000e+00 : f32
    %279 = vector.broadcast %cst_80 : f32 to vector<8x32xf32>
    %280 = tpu.concatenate %51, %278 in 1 : vector<8x32xf32>, vector<8x32xf32> -> vector<8x64xf32>
    %cst_81 = arith.constant dense<0.000000e+00> : vector<8x128xf32>
    %281 = tpu.matmul %280, %276, %cst_81 {dimension_numbers = #tpu.dot_dimension_numbers<[1], [0], [0], [1], [0, 0, 1, 1], [], []>} : vector<8x64xf32>, vector<64x128xf32>, vector<8x128xf32> -> vector<8x128xf32>
    %282 = vector.broadcast %277 : vector<1x128xf32> to vector<8x128xf32>
    %283 = arith.addf %281, %282 : vector<8x128xf32>
    %284 = tpu.iota {dimensions = array<i32: 1>} : vector<8x128xi32>
    %c64_i32_82 = arith.constant 64 : i32
    %285 = vector.broadcast %c64_i32_82 : i32 to vector<8x128xi32>
    %286 = arith.cmpi sge, %284, %285 : vector<8x128xi32>
    %c96_i32_83 = arith.constant 96 : i32
    %287 = vector.broadcast %c96_i32_83 : i32 to vector<8x128xi32>
    %288 = arith.cmpi slt, %284, %287 : vector<8x128xi32>
    %289 = arith.andi %286, %288 : vector<8x128xi1>
    %cst_84 = arith.constant 2.000000e+00 : f32
    %290 = vector.broadcast %cst_84 : f32 to vector<8x128xf32>
    %291 = arith.mulf %290, %283 : vector<8x128xf32>
    %292 = arith.select %289, %291, %283 : vector<8x128xi1>, vector<8x128xf32>
    %293 = arith.negf %292 : vector<8x128xf32>
    %294 = math.exp %293 : vector<8x128xf32>
    %cst_85 = arith.constant 1.000000e+00 : f32
    %295 = vector.broadcast %cst_85 : f32 to vector<8x128xf32>
    %296 = arith.addf %295, %294 : vector<8x128xf32>
    %297 = arith.divf %295, %296 : vector<8x128xf32>
    %cst_86 = arith.constant 2.000000e+00 : f32
    %298 = vector.broadcast %cst_86 : f32 to vector<8x128xf32>
    %299 = arith.mulf %298, %297 : vector<8x128xf32>
    %cst_87 = arith.constant 1.000000e+00 : f32
    %300 = vector.broadcast %cst_87 : f32 to vector<8x128xf32>
    %301 = arith.subf %299, %300 : vector<8x128xf32>
    %302 = arith.select %289, %301, %297 : vector<8x128xi1>, vector<8x128xf32>
    %303 = vector.extract_strided_slice %302 {offsets = [0, 0], sizes = [8, 32], strides = [1, 1]} : vector<8x128xf32> to vector<8x32xf32>
    %304 = vector.extract_strided_slice %302 {offsets = [0, 32], sizes = [8, 32], strides = [1, 1]} : vector<8x128xf32> to vector<8x32xf32>
    %305 = vector.extract_strided_slice %302 {offsets = [0, 64], sizes = [8, 32], strides = [1, 1]} : vector<8x128xf32> to vector<8x32xf32>
    %306 = vector.extract_strided_slice %302 {offsets = [0, 96], sizes = [8, 32], strides = [1, 1]} : vector<8x128xf32> to vector<8x32xf32>
    %307 = arith.mulf %304, %279 : vector<8x32xf32>
    %308 = arith.mulf %303, %305 : vector<8x32xf32>
    %309 = arith.addf %307, %308 : vector<8x32xf32>
    %310 = math.tanh %309 : vector<8x32xf32>
    %311 = arith.mulf %306, %310 : vector<8x32xf32>
    %312 = tpu.concatenate %83, %311 in 1 : vector<8x32xf32>, vector<8x32xf32> -> vector<8x64xf32>
    %cst_88 = arith.constant dense<0.000000e+00> : vector<8x128xf32>
    %313 = tpu.matmul %312, %276, %cst_88 {dimension_numbers = #tpu.dot_dimension_numbers<[1], [0], [0], [1], [0, 0, 1, 1], [], []>} : vector<8x64xf32>, vector<64x128xf32>, vector<8x128xf32> -> vector<8x128xf32>
    %314 = vector.broadcast %277 : vector<1x128xf32> to vector<8x128xf32>
    %315 = arith.addf %313, %314 : vector<8x128xf32>
    %316 = tpu.iota {dimensions = array<i32: 1>} : vector<8x128xi32>
    %c64_i32_89 = arith.constant 64 : i32
    %317 = vector.broadcast %c64_i32_89 : i32 to vector<8x128xi32>
    %318 = arith.cmpi sge, %316, %317 : vector<8x128xi32>
    %c96_i32_90 = arith.constant 96 : i32
    %319 = vector.broadcast %c96_i32_90 : i32 to vector<8x128xi32>
    %320 = arith.cmpi slt, %316, %319 : vector<8x128xi32>
    %321 = arith.andi %318, %320 : vector<8x128xi1>
    %cst_91 = arith.constant 2.000000e+00 : f32
    %322 = vector.broadcast %cst_91 : f32 to vector<8x128xf32>
    %323 = arith.mulf %322, %315 : vector<8x128xf32>
    %324 = arith.select %321, %323, %315 : vector<8x128xi1>, vector<8x128xf32>
    %325 = arith.negf %324 : vector<8x128xf32>
    %326 = math.exp %325 : vector<8x128xf32>
    %cst_92 = arith.constant 1.000000e+00 : f32
    %327 = vector.broadcast %cst_92 : f32 to vector<8x128xf32>
    %328 = arith.addf %327, %326 : vector<8x128xf32>
    %329 = arith.divf %327, %328 : vector<8x128xf32>
    %cst_93 = arith.constant 2.000000e+00 : f32
    %330 = vector.broadcast %cst_93 : f32 to vector<8x128xf32>
    %331 = arith.mulf %330, %329 : vector<8x128xf32>
    %cst_94 = arith.constant 1.000000e+00 : f32
    %332 = vector.broadcast %cst_94 : f32 to vector<8x128xf32>
    %333 = arith.subf %331, %332 : vector<8x128xf32>
    %334 = arith.select %321, %333, %329 : vector<8x128xi1>, vector<8x128xf32>
    %335 = vector.extract_strided_slice %334 {offsets = [0, 0], sizes = [8, 32], strides = [1, 1]} : vector<8x128xf32> to vector<8x32xf32>
    %336 = vector.extract_strided_slice %334 {offsets = [0, 32], sizes = [8, 32], strides = [1, 1]} : vector<8x128xf32> to vector<8x32xf32>
    %337 = vector.extract_strided_slice %334 {offsets = [0, 64], sizes = [8, 32], strides = [1, 1]} : vector<8x128xf32> to vector<8x32xf32>
    %338 = vector.extract_strided_slice %334 {offsets = [0, 96], sizes = [8, 32], strides = [1, 1]} : vector<8x128xf32> to vector<8x32xf32>
    %339 = arith.mulf %336, %309 : vector<8x32xf32>
    %340 = arith.mulf %335, %337 : vector<8x32xf32>
    %341 = arith.addf %339, %340 : vector<8x32xf32>
    %342 = math.tanh %341 : vector<8x32xf32>
    %343 = arith.mulf %338, %342 : vector<8x32xf32>
    %344 = tpu.concatenate %115, %343 in 1 : vector<8x32xf32>, vector<8x32xf32> -> vector<8x64xf32>
    %cst_95 = arith.constant dense<0.000000e+00> : vector<8x128xf32>
    %345 = tpu.matmul %344, %276, %cst_95 {dimension_numbers = #tpu.dot_dimension_numbers<[1], [0], [0], [1], [0, 0, 1, 1], [], []>} : vector<8x64xf32>, vector<64x128xf32>, vector<8x128xf32> -> vector<8x128xf32>
    %346 = vector.broadcast %277 : vector<1x128xf32> to vector<8x128xf32>
    %347 = arith.addf %345, %346 : vector<8x128xf32>
    %348 = tpu.iota {dimensions = array<i32: 1>} : vector<8x128xi32>
    %c64_i32_96 = arith.constant 64 : i32
    %349 = vector.broadcast %c64_i32_96 : i32 to vector<8x128xi32>
    %350 = arith.cmpi sge, %348, %349 : vector<8x128xi32>
    %c96_i32_97 = arith.constant 96 : i32
    %351 = vector.broadcast %c96_i32_97 : i32 to vector<8x128xi32>
    %352 = arith.cmpi slt, %348, %351 : vector<8x128xi32>
    %353 = arith.andi %350, %352 : vector<8x128xi1>
    %cst_98 = arith.constant 2.000000e+00 : f32
    %354 = vector.broadcast %cst_98 : f32 to vector<8x128xf32>
    %355 = arith.mulf %354, %347 : vector<8x128xf32>
    %356 = arith.select %353, %355, %347 : vector<8x128xi1>, vector<8x128xf32>
    %357 = arith.negf %356 : vector<8x128xf32>
    %358 = math.exp %357 : vector<8x128xf32>
    %cst_99 = arith.constant 1.000000e+00 : f32
    %359 = vector.broadcast %cst_99 : f32 to vector<8x128xf32>
    %360 = arith.addf %359, %358 : vector<8x128xf32>
    %361 = arith.divf %359, %360 : vector<8x128xf32>
    %cst_100 = arith.constant 2.000000e+00 : f32
    %362 = vector.broadcast %cst_100 : f32 to vector<8x128xf32>
    %363 = arith.mulf %362, %361 : vector<8x128xf32>
    %cst_101 = arith.constant 1.000000e+00 : f32
    %364 = vector.broadcast %cst_101 : f32 to vector<8x128xf32>
    %365 = arith.subf %363, %364 : vector<8x128xf32>
    %366 = arith.select %353, %365, %361 : vector<8x128xi1>, vector<8x128xf32>
    %367 = vector.extract_strided_slice %366 {offsets = [0, 0], sizes = [8, 32], strides = [1, 1]} : vector<8x128xf32> to vector<8x32xf32>
    %368 = vector.extract_strided_slice %366 {offsets = [0, 32], sizes = [8, 32], strides = [1, 1]} : vector<8x128xf32> to vector<8x32xf32>
    %369 = vector.extract_strided_slice %366 {offsets = [0, 64], sizes = [8, 32], strides = [1, 1]} : vector<8x128xf32> to vector<8x32xf32>
    %370 = vector.extract_strided_slice %366 {offsets = [0, 96], sizes = [8, 32], strides = [1, 1]} : vector<8x128xf32> to vector<8x32xf32>
    %371 = arith.mulf %368, %341 : vector<8x32xf32>
    %372 = arith.mulf %367, %369 : vector<8x32xf32>
    %373 = arith.addf %371, %372 : vector<8x32xf32>
    %374 = math.tanh %373 : vector<8x32xf32>
    %375 = arith.mulf %370, %374 : vector<8x32xf32>
    %376 = tpu.concatenate %147, %375 in 1 : vector<8x32xf32>, vector<8x32xf32> -> vector<8x64xf32>
    %cst_102 = arith.constant dense<0.000000e+00> : vector<8x128xf32>
    %377 = tpu.matmul %376, %276, %cst_102 {dimension_numbers = #tpu.dot_dimension_numbers<[1], [0], [0], [1], [0, 0, 1, 1], [], []>} : vector<8x64xf32>, vector<64x128xf32>, vector<8x128xf32> -> vector<8x128xf32>
    %378 = vector.broadcast %277 : vector<1x128xf32> to vector<8x128xf32>
    %379 = arith.addf %377, %378 : vector<8x128xf32>
    %380 = tpu.iota {dimensions = array<i32: 1>} : vector<8x128xi32>
    %c64_i32_103 = arith.constant 64 : i32
    %381 = vector.broadcast %c64_i32_103 : i32 to vector<8x128xi32>
    %382 = arith.cmpi sge, %380, %381 : vector<8x128xi32>
    %c96_i32_104 = arith.constant 96 : i32
    %383 = vector.broadcast %c96_i32_104 : i32 to vector<8x128xi32>
    %384 = arith.cmpi slt, %380, %383 : vector<8x128xi32>
    %385 = arith.andi %382, %384 : vector<8x128xi1>
    %cst_105 = arith.constant 2.000000e+00 : f32
    %386 = vector.broadcast %cst_105 : f32 to vector<8x128xf32>
    %387 = arith.mulf %386, %379 : vector<8x128xf32>
    %388 = arith.select %385, %387, %379 : vector<8x128xi1>, vector<8x128xf32>
    %389 = arith.negf %388 : vector<8x128xf32>
    %390 = math.exp %389 : vector<8x128xf32>
    %cst_106 = arith.constant 1.000000e+00 : f32
    %391 = vector.broadcast %cst_106 : f32 to vector<8x128xf32>
    %392 = arith.addf %391, %390 : vector<8x128xf32>
    %393 = arith.divf %391, %392 : vector<8x128xf32>
    %cst_107 = arith.constant 2.000000e+00 : f32
    %394 = vector.broadcast %cst_107 : f32 to vector<8x128xf32>
    %395 = arith.mulf %394, %393 : vector<8x128xf32>
    %cst_108 = arith.constant 1.000000e+00 : f32
    %396 = vector.broadcast %cst_108 : f32 to vector<8x128xf32>
    %397 = arith.subf %395, %396 : vector<8x128xf32>
    %398 = arith.select %385, %397, %393 : vector<8x128xi1>, vector<8x128xf32>
    %399 = vector.extract_strided_slice %398 {offsets = [0, 0], sizes = [8, 32], strides = [1, 1]} : vector<8x128xf32> to vector<8x32xf32>
    %400 = vector.extract_strided_slice %398 {offsets = [0, 32], sizes = [8, 32], strides = [1, 1]} : vector<8x128xf32> to vector<8x32xf32>
    %401 = vector.extract_strided_slice %398 {offsets = [0, 64], sizes = [8, 32], strides = [1, 1]} : vector<8x128xf32> to vector<8x32xf32>
    %402 = vector.extract_strided_slice %398 {offsets = [0, 96], sizes = [8, 32], strides = [1, 1]} : vector<8x128xf32> to vector<8x32xf32>
    %403 = arith.mulf %400, %373 : vector<8x32xf32>
    %404 = arith.mulf %399, %401 : vector<8x32xf32>
    %405 = arith.addf %403, %404 : vector<8x32xf32>
    %406 = math.tanh %405 : vector<8x32xf32>
    %407 = arith.mulf %402, %406 : vector<8x32xf32>
    %408 = tpu.concatenate %179, %407 in 1 : vector<8x32xf32>, vector<8x32xf32> -> vector<8x64xf32>
    %cst_109 = arith.constant dense<0.000000e+00> : vector<8x128xf32>
    %409 = tpu.matmul %408, %276, %cst_109 {dimension_numbers = #tpu.dot_dimension_numbers<[1], [0], [0], [1], [0, 0, 1, 1], [], []>} : vector<8x64xf32>, vector<64x128xf32>, vector<8x128xf32> -> vector<8x128xf32>
    %410 = vector.broadcast %277 : vector<1x128xf32> to vector<8x128xf32>
    %411 = arith.addf %409, %410 : vector<8x128xf32>
    %412 = tpu.iota {dimensions = array<i32: 1>} : vector<8x128xi32>
    %c64_i32_110 = arith.constant 64 : i32
    %413 = vector.broadcast %c64_i32_110 : i32 to vector<8x128xi32>
    %414 = arith.cmpi sge, %412, %413 : vector<8x128xi32>
    %c96_i32_111 = arith.constant 96 : i32
    %415 = vector.broadcast %c96_i32_111 : i32 to vector<8x128xi32>
    %416 = arith.cmpi slt, %412, %415 : vector<8x128xi32>
    %417 = arith.andi %414, %416 : vector<8x128xi1>
    %cst_112 = arith.constant 2.000000e+00 : f32
    %418 = vector.broadcast %cst_112 : f32 to vector<8x128xf32>
    %419 = arith.mulf %418, %411 : vector<8x128xf32>
    %420 = arith.select %417, %419, %411 : vector<8x128xi1>, vector<8x128xf32>
    %421 = arith.negf %420 : vector<8x128xf32>
    %422 = math.exp %421 : vector<8x128xf32>
    %cst_113 = arith.constant 1.000000e+00 : f32
    %423 = vector.broadcast %cst_113 : f32 to vector<8x128xf32>
    %424 = arith.addf %423, %422 : vector<8x128xf32>
    %425 = arith.divf %423, %424 : vector<8x128xf32>
    %cst_114 = arith.constant 2.000000e+00 : f32
    %426 = vector.broadcast %cst_114 : f32 to vector<8x128xf32>
    %427 = arith.mulf %426, %425 : vector<8x128xf32>
    %cst_115 = arith.constant 1.000000e+00 : f32
    %428 = vector.broadcast %cst_115 : f32 to vector<8x128xf32>
    %429 = arith.subf %427, %428 : vector<8x128xf32>
    %430 = arith.select %417, %429, %425 : vector<8x128xi1>, vector<8x128xf32>
    %431 = vector.extract_strided_slice %430 {offsets = [0, 0], sizes = [8, 32], strides = [1, 1]} : vector<8x128xf32> to vector<8x32xf32>
    %432 = vector.extract_strided_slice %430 {offsets = [0, 32], sizes = [8, 32], strides = [1, 1]} : vector<8x128xf32> to vector<8x32xf32>
    %433 = vector.extract_strided_slice %430 {offsets = [0, 64], sizes = [8, 32], strides = [1, 1]} : vector<8x128xf32> to vector<8x32xf32>
    %434 = vector.extract_strided_slice %430 {offsets = [0, 96], sizes = [8, 32], strides = [1, 1]} : vector<8x128xf32> to vector<8x32xf32>
    %435 = arith.mulf %432, %405 : vector<8x32xf32>
    %436 = arith.mulf %431, %433 : vector<8x32xf32>
    %437 = arith.addf %435, %436 : vector<8x32xf32>
    %438 = math.tanh %437 : vector<8x32xf32>
    %439 = arith.mulf %434, %438 : vector<8x32xf32>
    %440 = tpu.concatenate %211, %439 in 1 : vector<8x32xf32>, vector<8x32xf32> -> vector<8x64xf32>
    %cst_116 = arith.constant dense<0.000000e+00> : vector<8x128xf32>
    %441 = tpu.matmul %440, %276, %cst_116 {dimension_numbers = #tpu.dot_dimension_numbers<[1], [0], [0], [1], [0, 0, 1, 1], [], []>} : vector<8x64xf32>, vector<64x128xf32>, vector<8x128xf32> -> vector<8x128xf32>
    %442 = vector.broadcast %277 : vector<1x128xf32> to vector<8x128xf32>
    %443 = arith.addf %441, %442 : vector<8x128xf32>
    %444 = tpu.iota {dimensions = array<i32: 1>} : vector<8x128xi32>
    %c64_i32_117 = arith.constant 64 : i32
    %445 = vector.broadcast %c64_i32_117 : i32 to vector<8x128xi32>
    %446 = arith.cmpi sge, %444, %445 : vector<8x128xi32>
    %c96_i32_118 = arith.constant 96 : i32
    %447 = vector.broadcast %c96_i32_118 : i32 to vector<8x128xi32>
    %448 = arith.cmpi slt, %444, %447 : vector<8x128xi32>
    %449 = arith.andi %446, %448 : vector<8x128xi1>
    %cst_119 = arith.constant 2.000000e+00 : f32
    %450 = vector.broadcast %cst_119 : f32 to vector<8x128xf32>
    %451 = arith.mulf %450, %443 : vector<8x128xf32>
    %452 = arith.select %449, %451, %443 : vector<8x128xi1>, vector<8x128xf32>
    %453 = arith.negf %452 : vector<8x128xf32>
    %454 = math.exp %453 : vector<8x128xf32>
    %cst_120 = arith.constant 1.000000e+00 : f32
    %455 = vector.broadcast %cst_120 : f32 to vector<8x128xf32>
    %456 = arith.addf %455, %454 : vector<8x128xf32>
    %457 = arith.divf %455, %456 : vector<8x128xf32>
    %cst_121 = arith.constant 2.000000e+00 : f32
    %458 = vector.broadcast %cst_121 : f32 to vector<8x128xf32>
    %459 = arith.mulf %458, %457 : vector<8x128xf32>
    %cst_122 = arith.constant 1.000000e+00 : f32
    %460 = vector.broadcast %cst_122 : f32 to vector<8x128xf32>
    %461 = arith.subf %459, %460 : vector<8x128xf32>
    %462 = arith.select %449, %461, %457 : vector<8x128xi1>, vector<8x128xf32>
    %463 = vector.extract_strided_slice %462 {offsets = [0, 0], sizes = [8, 32], strides = [1, 1]} : vector<8x128xf32> to vector<8x32xf32>
    %464 = vector.extract_strided_slice %462 {offsets = [0, 32], sizes = [8, 32], strides = [1, 1]} : vector<8x128xf32> to vector<8x32xf32>
    %465 = vector.extract_strided_slice %462 {offsets = [0, 64], sizes = [8, 32], strides = [1, 1]} : vector<8x128xf32> to vector<8x32xf32>
    %466 = vector.extract_strided_slice %462 {offsets = [0, 96], sizes = [8, 32], strides = [1, 1]} : vector<8x128xf32> to vector<8x32xf32>
    %467 = arith.mulf %464, %437 : vector<8x32xf32>
    %468 = arith.mulf %463, %465 : vector<8x32xf32>
    %469 = arith.addf %467, %468 : vector<8x32xf32>
    %470 = math.tanh %469 : vector<8x32xf32>
    %471 = arith.mulf %466, %470 : vector<8x32xf32>
    %472 = tpu.concatenate %243, %471 in 1 : vector<8x32xf32>, vector<8x32xf32> -> vector<8x64xf32>
    %cst_123 = arith.constant dense<0.000000e+00> : vector<8x128xf32>
    %473 = tpu.matmul %472, %276, %cst_123 {dimension_numbers = #tpu.dot_dimension_numbers<[1], [0], [0], [1], [0, 0, 1, 1], [], []>} : vector<8x64xf32>, vector<64x128xf32>, vector<8x128xf32> -> vector<8x128xf32>
    %474 = vector.broadcast %277 : vector<1x128xf32> to vector<8x128xf32>
    %475 = arith.addf %473, %474 : vector<8x128xf32>
    %476 = tpu.iota {dimensions = array<i32: 1>} : vector<8x128xi32>
    %c64_i32_124 = arith.constant 64 : i32
    %477 = vector.broadcast %c64_i32_124 : i32 to vector<8x128xi32>
    %478 = arith.cmpi sge, %476, %477 : vector<8x128xi32>
    %c96_i32_125 = arith.constant 96 : i32
    %479 = vector.broadcast %c96_i32_125 : i32 to vector<8x128xi32>
    %480 = arith.cmpi slt, %476, %479 : vector<8x128xi32>
    %481 = arith.andi %478, %480 : vector<8x128xi1>
    %cst_126 = arith.constant 2.000000e+00 : f32
    %482 = vector.broadcast %cst_126 : f32 to vector<8x128xf32>
    %483 = arith.mulf %482, %475 : vector<8x128xf32>
    %484 = arith.select %481, %483, %475 : vector<8x128xi1>, vector<8x128xf32>
    %485 = arith.negf %484 : vector<8x128xf32>
    %486 = math.exp %485 : vector<8x128xf32>
    %cst_127 = arith.constant 1.000000e+00 : f32
    %487 = vector.broadcast %cst_127 : f32 to vector<8x128xf32>
    %488 = arith.addf %487, %486 : vector<8x128xf32>
    %489 = arith.divf %487, %488 : vector<8x128xf32>
    %cst_128 = arith.constant 2.000000e+00 : f32
    %490 = vector.broadcast %cst_128 : f32 to vector<8x128xf32>
    %491 = arith.mulf %490, %489 : vector<8x128xf32>
    %cst_129 = arith.constant 1.000000e+00 : f32
    %492 = vector.broadcast %cst_129 : f32 to vector<8x128xf32>
    %493 = arith.subf %491, %492 : vector<8x128xf32>
    %494 = arith.select %481, %493, %489 : vector<8x128xi1>, vector<8x128xf32>
    %495 = vector.extract_strided_slice %494 {offsets = [0, 0], sizes = [8, 32], strides = [1, 1]} : vector<8x128xf32> to vector<8x32xf32>
    %496 = vector.extract_strided_slice %494 {offsets = [0, 32], sizes = [8, 32], strides = [1, 1]} : vector<8x128xf32> to vector<8x32xf32>
    %497 = vector.extract_strided_slice %494 {offsets = [0, 64], sizes = [8, 32], strides = [1, 1]} : vector<8x128xf32> to vector<8x32xf32>
    %498 = vector.extract_strided_slice %494 {offsets = [0, 96], sizes = [8, 32], strides = [1, 1]} : vector<8x128xf32> to vector<8x32xf32>
    %499 = arith.mulf %496, %469 : vector<8x32xf32>
    %500 = arith.mulf %495, %497 : vector<8x32xf32>
    %501 = arith.addf %499, %500 : vector<8x32xf32>
    %502 = math.tanh %501 : vector<8x32xf32>
    %503 = arith.mulf %498, %502 : vector<8x32xf32>
    %504 = tpu.concatenate %275, %503 in 1 : vector<8x32xf32>, vector<8x32xf32> -> vector<8x64xf32>
    %cst_130 = arith.constant dense<0.000000e+00> : vector<8x128xf32>
    %505 = tpu.matmul %504, %276, %cst_130 {dimension_numbers = #tpu.dot_dimension_numbers<[1], [0], [0], [1], [0, 0, 1, 1], [], []>} : vector<8x64xf32>, vector<64x128xf32>, vector<8x128xf32> -> vector<8x128xf32>
    %506 = vector.broadcast %277 : vector<1x128xf32> to vector<8x128xf32>
    %507 = arith.addf %505, %506 : vector<8x128xf32>
    %508 = tpu.iota {dimensions = array<i32: 1>} : vector<8x128xi32>
    %c64_i32_131 = arith.constant 64 : i32
    %509 = vector.broadcast %c64_i32_131 : i32 to vector<8x128xi32>
    %510 = arith.cmpi sge, %508, %509 : vector<8x128xi32>
    %c96_i32_132 = arith.constant 96 : i32
    %511 = vector.broadcast %c96_i32_132 : i32 to vector<8x128xi32>
    %512 = arith.cmpi slt, %508, %511 : vector<8x128xi32>
    %513 = arith.andi %510, %512 : vector<8x128xi1>
    %cst_133 = arith.constant 2.000000e+00 : f32
    %514 = vector.broadcast %cst_133 : f32 to vector<8x128xf32>
    %515 = arith.mulf %514, %507 : vector<8x128xf32>
    %516 = arith.select %513, %515, %507 : vector<8x128xi1>, vector<8x128xf32>
    %517 = arith.negf %516 : vector<8x128xf32>
    %518 = math.exp %517 : vector<8x128xf32>
    %cst_134 = arith.constant 1.000000e+00 : f32
    %519 = vector.broadcast %cst_134 : f32 to vector<8x128xf32>
    %520 = arith.addf %519, %518 : vector<8x128xf32>
    %521 = arith.divf %519, %520 : vector<8x128xf32>
    %cst_135 = arith.constant 2.000000e+00 : f32
    %522 = vector.broadcast %cst_135 : f32 to vector<8x128xf32>
    %523 = arith.mulf %522, %521 : vector<8x128xf32>
    %cst_136 = arith.constant 1.000000e+00 : f32
    %524 = vector.broadcast %cst_136 : f32 to vector<8x128xf32>
    %525 = arith.subf %523, %524 : vector<8x128xf32>
    %526 = arith.select %513, %525, %521 : vector<8x128xi1>, vector<8x128xf32>
    %527 = vector.extract_strided_slice %526 {offsets = [0, 0], sizes = [8, 32], strides = [1, 1]} : vector<8x128xf32> to vector<8x32xf32>
    %528 = vector.extract_strided_slice %526 {offsets = [0, 32], sizes = [8, 32], strides = [1, 1]} : vector<8x128xf32> to vector<8x32xf32>
    %529 = vector.extract_strided_slice %526 {offsets = [0, 64], sizes = [8, 32], strides = [1, 1]} : vector<8x128xf32> to vector<8x32xf32>
    %530 = vector.extract_strided_slice %526 {offsets = [0, 96], sizes = [8, 32], strides = [1, 1]} : vector<8x128xf32> to vector<8x32xf32>
    %531 = arith.mulf %528, %501 : vector<8x32xf32>
    %532 = arith.mulf %527, %529 : vector<8x32xf32>
    %533 = arith.addf %531, %532 : vector<8x32xf32>
    %534 = math.tanh %533 : vector<8x32xf32>
    %535 = arith.mulf %530, %534 : vector<8x32xf32>
    %cst_137 = arith.constant 0.000000e+00 : f32
    %536 = vector.broadcast %cst_137 : f32 to vector<1x32xf32>
    %537 = tpu.concatenate %536, %535, %536 in 0 : vector<1x32xf32>, vector<8x32xf32>, vector<1x32xf32> -> vector<10x32xf32>
    %538 = vector.extract_strided_slice %537 {offsets = [0, 0], sizes = [8, 32], strides = [1, 1]} : vector<10x32xf32> to vector<8x32xf32>
    %539 = vector.extract_strided_slice %537 {offsets = [1, 0], sizes = [8, 32], strides = [1, 1]} : vector<10x32xf32> to vector<8x32xf32>
    %540 = vector.extract_strided_slice %537 {offsets = [2, 0], sizes = [8, 32], strides = [1, 1]} : vector<10x32xf32> to vector<8x32xf32>
    %541 = tpu.concatenate %538, %539, %540 in 1 : vector<8x32xf32>, vector<8x32xf32>, vector<8x32xf32> -> vector<8x96xf32>
    %c0_138 = arith.constant 0 : index
    %c0_139 = arith.constant 0 : index
    %542 = vector.load %arg5[%c0_138, %c0_139] : memref<96x32xf32, #tpu.memory_space<vmem>>, vector<96x32xf32>
    %cst_140 = arith.constant dense<0.000000e+00> : vector<8x32xf32>
    %543 = tpu.matmul %541, %542, %cst_140 {dimension_numbers = #tpu.dot_dimension_numbers<[1], [0], [0], [1], [0, 0, 1, 1], [], []>} : vector<8x96xf32>, vector<96x32xf32>, vector<8x32xf32> -> vector<8x32xf32>
    %c0_141 = arith.constant 0 : index
    %c0_142 = arith.constant 0 : index
    %544 = vector.load %arg6[%c0_141, %c0_142] : memref<1x32xf32, #tpu.memory_space<vmem>>, vector<1x32xf32>
    %545 = vector.broadcast %544 : vector<1x32xf32> to vector<8x32xf32>
    %546 = arith.addf %543, %545 : vector<8x32xf32>
    %c0_143 = arith.constant 0 : index
    %c0_144 = arith.constant 0 : index
    %547 = vector.load %arg7[%c0_143, %c0_144] : memref<32x8xf32, #tpu.memory_space<vmem>>, vector<32x8xf32>
    %cst_145 = arith.constant dense<0.000000e+00> : vector<8x8xf32>
    %548 = tpu.matmul %546, %547, %cst_145 {dimension_numbers = #tpu.dot_dimension_numbers<[1], [0], [0], [1], [0, 0, 1, 1], [], []>} : vector<8x32xf32>, vector<32x8xf32>, vector<8x8xf32> -> vector<8x8xf32>
    %c0_146 = arith.constant 0 : index
    %c0_147 = arith.constant 0 : index
    %549 = vector.load %arg8[%c0_146, %c0_147] : memref<1x8xf32, #tpu.memory_space<vmem>>, vector<1x8xf32>
    %550 = vector.broadcast %549 : vector<1x8xf32> to vector<8x8xf32>
    %551 = arith.addf %548, %550 : vector<8x8xf32>
    %c0_148 = arith.constant 0 : index
    %c0_149 = arith.constant 0 : index
    %552 = vector.load %arg9[%c0_148, %c0_149] : memref<8x8xf32, #tpu.memory_space<vmem>>, vector<8x8xf32>
    tpu.vector_store %arg9[%c0_148, %c0_149], %551 {strides = array<i32>} : memref<8x8xf32, #tpu.memory_space<vmem>>, vector<8x8xf32>,
    return
  }
}

</mosaic_0001>

<llo_original>
// kernel: tpu_custom_call.1
$region0: #{tpu_custom_call.1}
  #allocation0 [shape = 'u32[]', space=smem, size = 0x4, offset = 0x4, fixed_abs, tag = 'smem constant byte address 0x4 - core index']
  #allocation1 [shape = 'u32[144,128]{1,0:T(1,128)}', space=vmem, size = 0x12000, scoped, tag = 'internal scratch']
  %s0 = inlined_call_operand.vmem [shape: f32[8,8,16], index: 0, kind: input, shape index: {}]
  %s1 = inlined_call_operand.hbm [shape: f32[48,128], index: 1, kind: input, shape index: {}]
  %s2 = inlined_call_operand.vmem [shape: f32[1,128], index: 2, kind: input, shape index: {}]
  %s3 = inlined_call_operand.vmem [shape: f32[64,128], index: 3, kind: input, shape index: {}]
  %s4 = inlined_call_operand.vmem [shape: f32[1,128], index: 4, kind: input, shape index: {}]
  %s5 = inlined_call_operand.vmem [shape: f32[96,32], index: 5, kind: input, shape index: {}]
  %s6 = inlined_call_operand.vmem [shape: f32[1,32], index: 6, kind: input, shape index: {}]
  %s7 = inlined_call_operand.vmem [shape: f32[32,8], index: 7, kind: input, shape index: {}]
  %s8 = inlined_call_operand.vmem [shape: f32[1,8], index: 8, kind: input, shape index: {}]
  %s9 = inlined_call_operand.hbm [shape: f32[8,8], index: 9, kind: output, shape index: {}]
  %s10 = sld [smem:[#allocation0]]
  $region50: #{tpu_custom_call.1} parent=0
    _
  %s12 = ssub.s32 1, %s10
  %s13 = scalar_select 0, %s12, %s10
  $region1: #{tpu_custom_call.1} parent=0
    #allocation2 [shape = 'u8[24576]{0}', space=vmem, size = 0x6000, scoped, tag = 'input window, operand 1, single buffered']
    #allocation3 [shape = 's32[1]{0}', space=sflag, size = 0x4, scoped, tag = 'scoped memory for tpu_custom_call.1']
    #allocation4 [shape = 's32[1]{0}', space=sflag, size = 0x4, scoped, tag = 'scoped memory for tpu_custom_call.1']
    #allocation5 [shape = 'u8[4096]{0}', space=vmem, size = 0x1000, scoped, tag = 'output window, operand 0, single buffered']
    %14 = vsyncpa [#allocation3], 0
    %15 = vsyncpa [#allocation4], 0
    // Predicated region
    $region2: #{tpu_custom_call.1} parent=1 // pred_check
      _
    $region3: #{tpu_custom_call.1} parent=1 // pred_check_branch
      %17 = sbr.rel (0) target = $region5
    $region4: #{tpu_custom_call.1} parent=1 // pred_region
      _
    $region5: #{tpu_custom_call.1} parent=1 // pred_fallthru
      _
    // Predicated region
    $region6: #{tpu_custom_call.1} parent=1 // pred_check
      _
    $region7: #{tpu_custom_call.1} parent=1 // pred_check_branch
      %19 = sbr.rel (0) target = $region9
    $region8: #{tpu_custom_call.1} parent=1 // pred_region
      %s21 = ssub.s32 768, 768
      %22 = vsyncadd [#allocation3], %s21
      %s23 = sshll.u32 [#allocation2], 4
      %s24 = int_to_ptr.vmem [resolvable:$true] %s23
      %29 = dma.hbm_to_vmem [thread:$0]  %s1, 768, %s24, [#allocation3], 128, 128, 8
    $region9: #{tpu_custom_call.1} parent=1 // pred_fallthru
      _
    // Predicated region
    $region10: #{tpu_custom_call.1} parent=1 // pred_check
      _
    $region11: #{tpu_custom_call.1} parent=1 // pred_check_branch
      %31 = sbr.rel (0) target = $region13
    $region12: #{tpu_custom_call.1} parent=1 // pred_region
      _
    $region13: #{tpu_custom_call.1} parent=1 // pred_fallthru
      _
    // Predicated region
    $region14: #{tpu_custom_call.1} parent=1 // pred_check
      _
    $region15: #{tpu_custom_call.1} parent=1 // pred_check_branch
      %33 = sbr.rel (0) target = $region17
    $region16: #{tpu_custom_call.1} parent=1 // pred_region
      _
    $region17: #{tpu_custom_call.1} parent=1 // pred_fallthru
      _
    // Predicated region
    $region18: #{tpu_custom_call.1} parent=1 // pred_check
      _
    $region19: #{tpu_custom_call.1} parent=1 // pred_check_branch
      %35 = sbr.rel (0) target = $region21
    $region20: #{tpu_custom_call.1} parent=1 // pred_region
      _
    $region21: #{tpu_custom_call.1} parent=1 // pred_fallthru
      _
    // Predicated region
    $region22: #{tpu_custom_call.1} parent=1 // pred_check
      _
    $region23: #{tpu_custom_call.1} parent=1 // pred_check_branch
      %37 = sbr.rel (0) target = $region25
    $region24: #{tpu_custom_call.1} parent=1 // pred_region
      _
    $region25: #{tpu_custom_call.1} parent=1 // pred_fallthru
      _
    // Predicated region
    $region26: #{tpu_custom_call.1} parent=1 // pred_check
      _
    $region27: #{tpu_custom_call.1} parent=1 // pred_check_branch
      %39 = sbr.rel (0) target = $region29
    $region28: #{tpu_custom_call.1} parent=1 // pred_region
      _
    $region29: #{tpu_custom_call.1} parent=1 // pred_fallthru
      _
    // Predicated region
    $region30: #{tpu_custom_call.1} parent=1 // pred_check
      _
    $region31: #{tpu_custom_call.1} parent=1 // pred_check_branch
      %41 = sbr.rel (0) target = $region33
    $region32: #{tpu_custom_call.1} parent=1 // pred_region
      _
    $region33: #{tpu_custom_call.1} parent=1 // pred_fallthru
      _
    // Predicated region
    $region34: #{tpu_custom_call.1} parent=1 // pred_check
      _
    $region35: #{tpu_custom_call.1} parent=1 // pred_check_branch
      %43 = sbr.rel (0) target = $region37
    $region36: #{tpu_custom_call.1} parent=1 // pred_region
      _
    $region37: #{tpu_custom_call.1} parent=1 // pred_fallthru
      _
    // Predicated region
    $region38: #{tpu_custom_call.1} parent=1 // pred_check
      _
    $region39: #{tpu_custom_call.1} parent=1 // pred_check_branch
      %45 = sbr.rel (0) target = $region41
    $region40: #{tpu_custom_call.1} parent=1 // pred_region
      %46 = dma.done [#allocation3], 768
    $region41: #{tpu_custom_call.1} parent=1 // pred_fallthru
      _
    %v47 = vld [vmem:[%s0] sm:$0xff]
    %s48 = scalar_lea.vmem %s0, 8
    %v49 = vld [vmem:[%s48] sm:$0xff]
    %s50 = scalar_lea.vmem %s0, 16
    %v51 = vld [vmem:[%s50] sm:$0xff]
    %s52 = scalar_lea.vmem %s0, 24
    %v53 = vld [vmem:[%s52] sm:$0xff]
    %s54 = scalar_lea.vmem %s0, 32
    %v55 = vld [vmem:[%s54] sm:$0xff]
    %s56 = scalar_lea.vmem %s0, 40
    %v57 = vld [vmem:[%s56] sm:$0xff]
    %s58 = scalar_lea.vmem %s0, 48
    %v59 = vld [vmem:[%s58] sm:$0xff]
    %s60 = scalar_lea.vmem %s0, 56
    %v61 = vld [vmem:[%s60] sm:$0xff]
    %v62 = vld [vmem:[#allocation2] sm:$0xff]
    %v63 = vld [vmem:[#allocation2 + $0x8] sm:$0xff]
    %v64 = vld [vmem:[#allocation2 + $0x10] sm:$0xff]
    %v65 = vld [vmem:[#allocation2 + $0x18] sm:$0xff]
    %v66 = vld [vmem:[#allocation2 + $0x20] sm:$0xff]
    %v67 = vld [vmem:[#allocation2 + $0x28] sm:$0xff]
    %v68 = vld [vmem:[%s2] sm:$0x1]
    %vm69 = vcmask 130048
    %v70 = vsel %vm69, %v47, 0.0
    %v72 = vlaneseq
    %v73 = vshrl.u32 %v72, 7
    %v74 = vsub.s32 0, %v73
    %v75 = vrot.slane %v68, %v74
    %vm77 = vcmask 392192
    %v79 = vsel %vm77, %v70, 0
    %81 = vmatprep.subr.mxu0 0.0
    %82 = vmatpush1.msra.mxu0 %v62
    %83 = vmatprep.subr.mxu0 0.0
    %84 = vmatpush1.msra.mxu0 %v63
    %85 = vmatprep.subr.mxu0 0.0
    %86 = vmatpush1.msra.mxu0 %v64
    %87 = vmatprep.subr.mxu0 0.0
    %88 = vmatpush1.msra.mxu0 %v65
    %89 = vmatprep.subr.mxu0 0.0
    %90 = vmatpush1.msra.mxu0 %v66
    %91 = vmatprep.subr.mxu0 0.0
    %92 = vmatpush1.msra.mxu0 %v67
    %93 = vmatprep.subr.mxu0 0.0
    %94 = vmatpush1.msra.mxu0 0.0
    %95 = vmatprep.subr.mxu0 0.0
    %96 = vmatpush1.msra.mxu0 0.0
    %97 = vmatprep.subr.mxu0 0.0
    %98 = vmatpush1.msra.mxu0 0.0
    %99 = vmatprep.subr.mxu0 0.0
    %100 = vmatpush1.msra.mxu0 0.0
    %101 = vmatprep.subr.mxu0 0.0
    %102 = vmatpush1.msra.mxu0 0.0
    %103 = vmatprep.subr.mxu0 0.0
    %104 = vmatpush1.msra.mxu0 0.0
    %105 = vmatprep.subr.mxu0 0.0
    %106 = vmatpush1.msra.mxu0 0.0
    %107 = vmatprep.subr.mxu0 0.0
    %108 = vmatpush1.msra.mxu0 0.0
    %109 = vmatprep.subr.mxu0 0.0
    %110 = vmatpush1.msra.mxu0 0.0
    %111 = vmatprep.subr.mxu0 0.0
    %112 = vmatpush1.msra.mxu0 0.0
    %113 = vmatprep.subr.mxu0 0.0
    %114 = vmatpush1.msra.mxu0 0.0
    %115 = vmatprep.subr.mxu0 0.0
    %116 = vmatpush1.msra.mxu0 0.0
    %117 = vmatprep.subr.mxu0 0.0
    %118 = vmatpush1.msra.mxu0 0.0
    %119 = vmatprep.subr.mxu0 0.0
    %120 = vmatpush1.msra.mxu0 0.0
    %121 = vmatprep.subr.mxu0 0.0
    %122 = vmatpush1.msra.mxu0 0.0
    %123 = vmatprep.subr.mxu0 0.0
    %124 = vmatpush1.msra.mxu0 0.0
    %125 = vmatprep.subr.mxu0 0.0
    %126 = vmatpush1.msra.mxu0 0.0
    %127 = vmatprep.subr.mxu0 0.0
    %128 = vmatpush1.msra.mxu0 0.0
    %129 = vmatprep.subr.mxu0 0.0
    %130 = vmatpush1.msra.mxu0 0.0
    %131 = vmatprep.subr.mxu0 0.0
    %132 = vmatpush1.msra.mxu0 0.0
    %133 = vmatprep.subr.mxu0 0.0
    %134 = vmatpush1.msra.mxu0 0.0
    %135 = vmatprep.subr.mxu0 0.0
    %136 = vmatpush1.msra.mxu0 0.0
    %137 = vmatprep.subr.mxu0 0.0
    %138 = vmatpush1.msra.mxu0 0.0
    %139 = vmatprep.subr.mxu0 0.0
    %140 = vmatpush1.msra.mxu0 0.0
    %141 = vmatprep.subr.mxu0 0.0
    %142 = vmatpush1.msra.mxu0 0.0
    %143 = vmatprep.subr.mxu0 0.0
    %144 = vmatpush1.msra.mxu0 0.0
    %145 = vmatprep.mubr.f32.mxu0 0.0
    %146 = vmatmul.mubr.f32.gmra.mrb[0].mxu0 %v79
    %v147 = vpop.f32.mrb[0].mxu0
    %v148 = vadd.f32 %v75, %v147
    %v149 = vpop.f32.mrb[0].mxu0
    %150 = vdwg.mxu0
    %v151 = vlaneseq
    %v152 = vand.u32 %v151, 127
    %vm153 = vcmp.ge.s32.totalorder %v152, 64
    %vm154 = vcmp.lt.s32.totalorder %v152, 96
    %vm155 = vmand %vm153, %vm154
    %v156 = vmul.f32 %v148, 2.0
    %v157 = vsel %vm155, %v156, %v148
    %v158 = vxor.u32 %v157, 2147483648
    %v159 = vmul.f32 %v158, 1.442695
    %v160 = vpow.pop %v159
    %v161 = vadd.f32 %v160, 1.0
    %v162 = vrcp.pop %v161
    %v163 = vmul.f32 1.0, %v162
    %v164 = vmul.f32 %v163, 2.0
    %v165 = vsub.f32 %v164, 1.0
    %v166 = vsel %vm155, %v165, %v163
    %v167 = vmul.f32 %v166, 0.0
    %169 = vrot.lane.b32.xlu0 %v166, 64
    %v170 = vpop.permute.xlu0 %169
    %v172 = vmul.f32 %v166, %v170
    %174 = vrot.lane.b32.xlu0 %v172, 32
    %v175 = vpop.permute.xlu0 %174
    %v177 = vadd.f32 %v167, %v175
    %v178 = vtanh.pop %v177
    %180 = vrot.lane.b32.xlu0 %v178, 64
    %v181 = vpop.permute.xlu0 %180
    %v183 = vmul.f32 %v166, %v181
    %185 = vrot.lane.b32.xlu0 %v183, 48
    %v186 = vpop.permute.xlu0 %185
    %v188 = vsel %vm69, %v49, %v186
    %v190 = vsel %vm77, %v188, 0
    %192 = vmatprep.subr.mxu0 0.0
    %193 = vmatpush1.msra.mxu0 %v62
    %194 = vmatprep.subr.mxu0 0.0
    %195 = vmatpush1.msra.mxu0 %v63
    %196 = vmatprep.subr.mxu0 0.0
    %197 = vmatpush1.msra.mxu0 %v64
    %198 = vmatprep.subr.mxu0 0.0
    %199 = vmatpush1.msra.mxu0 %v65
    %200 = vmatprep.subr.mxu0 0.0
    %201 = vmatpush1.msra.mxu0 %v66
    %202 = vmatprep.subr.mxu0 0.0
    %203 = vmatpush1.msra.mxu0 %v67
    %204 = vmatprep.subr.mxu0 0.0
    %205 = vmatpush1.msra.mxu0 0.0
    %206 = vmatprep.subr.mxu0 0.0
    %207 = vmatpush1.msra.mxu0 0.0
    %208 = vmatprep.subr.mxu0 0.0
    %209 = vmatpush1.msra.mxu0 0.0
    %210 = vmatprep.subr.mxu0 0.0
    %211 = vmatpush1.msra.mxu0 0.0
    %212 = vmatprep.subr.mxu0 0.0
    %213 = vmatpush1.msra.mxu0 0.0
    %214 = vmatprep.subr.mxu0 0.0
    %215 = vmatpush1.msra.mxu0 0.0
    %216 = vmatprep.subr.mxu0 0.0
    %217 = vmatpush1.msra.mxu0 0.0
    %218 = vmatprep.subr.mxu0 0.0
    %219 = vmatpush1.msra.mxu0 0.0
    %220 = vmatprep.subr.mxu0 0.0
    %221 = vmatpush1.msra.mxu0 0.0
    %222 = vmatprep.subr.mxu0 0.0
    %223 = vmatpush1.msra.mxu0 0.0
    %224 = vmatprep.subr.mxu0 0.0
    %225 = vmatpush1.msra.mxu0 0.0
    %226 = vmatprep.subr.mxu0 0.0
    %227 = vmatpush1.msra.mxu0 0.0
    %228 = vmatprep.subr.mxu0 0.0
    %229 = vmatpush1.msra.mxu0 0.0
    %230 = vmatprep.subr.mxu0 0.0
    %231 = vmatpush1.msra.mxu0 0.0
    %232 = vmatprep.subr.mxu0 0.0
    %233 = vmatpush1.msra.mxu0 0.0
    %234 = vmatprep.subr.mxu0 0.0
    %235 = vmatpush1.msra.mxu0 0.0
    %236 = vmatprep.subr.mxu0 0.0
    %237 = vmatpush1.msra.mxu0 0.0
    %238 = vmatprep.subr.mxu0 0.0
    %239 = vmatpush1.msra.mxu0 0.0
    %240 = vmatprep.subr.mxu0 0.0
    %241 = vmatpush1.msra.mxu0 0.0
    %242 = vmatprep.subr.mxu0 0.0
    %243 = vmatpush1.msra.mxu0 0.0
    %244 = vmatprep.subr.mxu0 0.0
    %245 = vmatpush1.msra.mxu0 0.0
    %246 = vmatprep.subr.mxu0 0.0
    %247 = vmatpush1.msra.mxu0 0.0
    %248 = vmatprep.subr.mxu0 0.0
    %249 = vmatpush1.msra.mxu0 0.0
    %250 = vmatprep.subr.mxu0 0.0
    %251 = vmatpush1.msra.mxu0 0.0
    %252 = vmatprep.subr.mxu0 0.0
    %253 = vmatpush1.msra.mxu0 0.0
    %254 = vmatprep.subr.mxu0 0.0
    %255 = vmatpush1.msra.mxu0 0.0
    %256 = vmatprep.mubr.f32.mxu0 0.0
    %257 = vmatmul.mubr.f32.gmra.mrb[0].mxu0 %v190
    %v258 = vpop.f32.mrb[0].mxu0
    %v259 = vadd.f32 %v75, %v258
    %v260 = vpop.f32.mrb[0].mxu0
    %261 = vdwg.mxu0
    %v262 = vmul.f32 %v259, 2.0
    %v263 = vsel %vm155, %v262, %v259
    %v264 = vxor.u32 %v263, 2147483648
    %v265 = vmul.f32 %v264, 1.442695
    %v266 = vpow.pop %v265
    %v267 = vadd.f32 %v266, 1.0
    %v268 = vrcp.pop %v267
    %v269 = vmul.f32 1.0, %v268
    %v270 = vmul.f32 %v269, 2.0
    %v271 = vsub.f32 %v270, 1.0
    %v272 = vsel %vm155, %v271, %v269
    %v273 = vmul.f32 %v272, %v177
    %275 = vrot.lane.b32.xlu0 %v272, 64
    %v276 = vpop.permute.xlu0 %275
    %v278 = vmul.f32 %v272, %v276
    %280 = vrot.lane.b32.xlu0 %v278, 32
    %v281 = vpop.permute.xlu0 %280
    %v283 = vadd.f32 %v273, %v281
    %v284 = vtanh.pop %v283
    %286 = vrot.lane.b32.xlu0 %v284, 64
    %v287 = vpop.permute.xlu0 %286
    %v289 = vmul.f32 %v272, %v287
    %291 = vrot.lane.b32.xlu0 %v289, 48
    %v292 = vpop.permute.xlu0 %291
    %v294 = vsel %vm69, %v51, %v292
    %v296 = vsel %vm77, %v294, 0
    %298 = vmatprep.subr.mxu0 0.0
    %299 = vmatpush1.msra.mxu0 %v62
    %300 = vmatprep.subr.mxu0 0.0
    %301 = vmatpush1.msra.mxu0 %v63
    %302 = vmatprep.subr.mxu0 0.0
    %303 = vmatpush1.msra.mxu0 %v64
    %304 = vmatprep.subr.mxu0 0.0
    %305 = vmatpush1.msra.mxu0 %v65
    %306 = vmatprep.subr.mxu0 0.0
    %307 = vmatpush1.msra.mxu0 %v66
    %308 = vmatprep.subr.mxu0 0.0
    %309 = vmatpush1.msra.mxu0 %v67
    %310 = vmatprep.subr.mxu0 0.0
    %311 = vmatpush1.msra.mxu0 0.0
    %312 = vmatprep.subr.mxu0 0.0
    %313 = vmatpush1.msra.mxu0 0.0
    %314 = vmatprep.subr.mxu0 0.0
    %315 = vmatpush1.msra.mxu0 0.0
    %316 = vmatprep.subr.mxu0 0.0
    %317 = vmatpush1.msra.mxu0 0.0
    %318 = vmatprep.subr.mxu0 0.0
    %319 = vmatpush1.msra.mxu0 0.0
    %320 = vmatprep.subr.mxu0 0.0
    %321 = vmatpush1.msra.mxu0 0.0
    %322 = vmatprep.subr.mxu0 0.0
    %323 = vmatpush1.msra.mxu0 0.0
    %324 = vmatprep.subr.mxu0 0.0
    %325 = vmatpush1.msra.mxu0 0.0
    %326 = vmatprep.subr.mxu0 0.0
    %327 = vmatpush1.msra.mxu0 0.0
    %328 = vmatprep.subr.mxu0 0.0
    %329 = vmatpush1.msra.mxu0 0.0
    %330 = vmatprep.subr.mxu0 0.0
    %331 = vmatpush1.msra.mxu0 0.0
    %332 = vmatprep.subr.mxu0 0.0
    %333 = vmatpush1.msra.mxu0 0.0
    %334 = vmatprep.subr.mxu0 0.0
    %335 = vmatpush1.msra.mxu0 0.0
    %336 = vmatprep.subr.mxu0 0.0
    %337 = vmatpush1.msra.mxu0 0.0
    %338 = vmatprep.subr.mxu0 0.0
    %339 = vmatpush1.msra.mxu0 0.0
    %340 = vmatprep.subr.mxu0 0.0
    %341 = vmatpush1.msra.mxu0 0.0
    %342 = vmatprep.subr.mxu0 0.0
    %343 = vmatpush1.msra.mxu0 0.0
    %344 = vmatprep.subr.mxu0 0.0
    %345 = vmatpush1.msra.mxu0 0.0
    %346 = vmatprep.subr.mxu0 0.0
    %347 = vmatpush1.msra.mxu0 0.0
    %348 = vmatprep.subr.mxu0 0.0
    %349 = vmatpush1.msra.mxu0 0.0
    %350 = vmatprep.subr.mxu0 0.0
    %351 = vmatpush1.msra.mxu0 0.0
    %352 = vmatprep.subr.mxu0 0.0
    %353 = vmatpush1.msra.mxu0 0.0
    %354 = vmatprep.subr.mxu0 0.0
    %355 = vmatpush1.msra.mxu0 0.0
    %356 = vmatprep.subr.mxu0 0.0
    %357 = vmatpush1.msra.mxu0 0.0
    %358 = vmatprep.subr.mxu0 0.0
    %359 = vmatpush1.msra.mxu0 0.0
    %360 = vmatprep.subr.mxu0 0.0
    %361 = vmatpush1.msra.mxu0 0.0
    %362 = vmatprep.mubr.f32.mxu0 0.0
    %363 = vmatmul.mubr.f32.gmra.mrb[0].mxu0 %v296
    %v364 = vpop.f32.mrb[0].mxu0
    %v365 = vadd.f32 %v75, %v364
    %v366 = vpop.f32.mrb[0].mxu0
    %367 = vdwg.mxu0
    %v368 = vmul.f32 %v365, 2.0
    %v369 = vsel %vm155, %v368, %v365
    %v370 = vxor.u32 %v369, 2147483648
    %v371 = vmul.f32 %v370, 1.442695
    %v372 = vpow.pop %v371
    %v373 = vadd.f32 %v372, 1.0
    %v374 = vrcp.pop %v373
    %v375 = vmul.f32 1.0, %v374
    %v376 = vmul.f32 %v375, 2.0
    %v377 = vsub.f32 %v376, 1.0
    %v378 = vsel %vm155, %v377, %v375
    %v379 = vmul.f32 %v378, %v283
    %381 = vrot.lane.b32.xlu0 %v378, 64
    %v382 = vpop.permute.xlu0 %381
    %v384 = vmul.f32 %v378, %v382
    %386 = vrot.lane.b32.xlu0 %v384, 32
    %v387 = vpop.permute.xlu0 %386
    %v389 = vadd.f32 %v379, %v387
    %v390 = vtanh.pop %v389
    %392 = vrot.lane.b32.xlu0 %v390, 64
    %v393 = vpop.permute.xlu0 %392
    %v395 = vmul.f32 %v378, %v393
    %397 = vrot.lane.b32.xlu0 %v395, 48
    %v398 = vpop.permute.xlu0 %397
    %v400 = vsel %vm69, %v53, %v398
    %v402 = vsel %vm77, %v400, 0
    %404 = vmatprep.subr.mxu0 0.0
    %405 = vmatpush1.msra.mxu0 %v62
    %406 = vmatprep.subr.mxu0 0.0
    %407 = vmatpush1.msra.mxu0 %v63
    %408 = vmatprep.subr.mxu0 0.0
    %409 = vmatpush1.msra.mxu0 %v64
    %410 = vmatprep.subr.mxu0 0.0
    %411 = vmatpush1.msra.mxu0 %v65
    %412 = vmatprep.subr.mxu0 0.0
    %413 = vmatpush1.msra.mxu0 %v66
    %414 = vmatprep.subr.mxu0 0.0
    %415 = vmatpush1.msra.mxu0 %v67
    %416 = vmatprep.subr.mxu0 0.0
    %417 = vmatpush1.msra.mxu0 0.0
    %418 = vmatprep.subr.mxu0 0.0
    %419 = vmatpush1.msra.mxu0 0.0
    %420 = vmatprep.subr.mxu0 0.0
    %421 = vmatpush1.msra.mxu0 0.0
    %422 = vmatprep.subr.mxu0 0.0
    %423 = vmatpush1.msra.mxu0 0.0
    %424 = vmatprep.subr.mxu0 0.0
    %425 = vmatpush1.msra.mxu0 0.0
    %426 = vmatprep.subr.mxu0 0.0
    %427 = vmatpush1.msra.mxu0 0.0
    %428 = vmatprep.subr.mxu0 0.0
    %429 = vmatpush1.msra.mxu0 0.0
    %430 = vmatprep.subr.mxu0 0.0
    %431 = vmatpush1.msra.mxu0 0.0
    %432 = vmatprep.subr.mxu0 0.0
    %433 = vmatpush1.msra.mxu0 0.0
    %434 = vmatprep.subr.mxu0 0.0
    %435 = vmatpush1.msra.mxu0 0.0
    %436 = vmatprep.subr.mxu0 0.0
    %437 = vmatpush1.msra.mxu0 0.0
    %438 = vmatprep.subr.mxu0 0.0
    %439 = vmatpush1.msra.mxu0 0.0
    %440 = vmatprep.subr.mxu0 0.0
    %441 = vmatpush1.msra.mxu0 0.0
    %442 = vmatprep.subr.mxu0 0.0
    %443 = vmatpush1.msra.mxu0 0.0
    %444 = vmatprep.subr.mxu0 0.0
    %445 = vmatpush1.msra.mxu0 0.0
    %446 = vmatprep.subr.mxu0 0.0
    %447 = vmatpush1.msra.mxu0 0.0
    %448 = vmatprep.subr.mxu0 0.0
    %449 = vmatpush1.msra.mxu0 0.0
    %450 = vmatprep.subr.mxu0 0.0
    %451 = vmatpush1.msra.mxu0 0.0
    %452 = vmatprep.subr.mxu0 0.0
    %453 = vmatpush1.msra.mxu0 0.0
    %454 = vmatprep.subr.mxu0 0.0
    %455 = vmatpush1.msra.mxu0 0.0
    %456 = vmatprep.subr.mxu0 0.0
    %457 = vmatpush1.msra.mxu0 0.0
    %458 = vmatprep.subr.mxu0 0.0
    %459 = vmatpush1.msra.mxu0 0.0
    %460 = vmatprep.subr.mxu0 0.0
    %461 = vmatpush1.msra.mxu0 0.0
    %462 = vmatprep.subr.mxu0 0.0
    %463 = vmatpush1.msra.mxu0 0.0
    %464 = vmatprep.subr.mxu0 0.0
    %465 = vmatpush1.msra.mxu0 0.0
    %466 = vmatprep.subr.mxu0 0.0
    %467 = vmatpush1.msra.mxu0 0.0
    %468 = vmatprep.mubr.f32.mxu0 0.0
    %469 = vmatmul.mubr.f32.gmra.mrb[0].mxu0 %v402
    %v470 = vpop.f32.mrb[0].mxu0
    %v471 = vadd.f32 %v75, %v470
    %v472 = vpop.f32.mrb[0].mxu0
    %473 = vdwg.mxu0
    %v474 = vmul.f32 %v471, 2.0
    %v475 = vsel %vm155, %v474, %v471
    %v476 = vxor.u32 %v475, 2147483648
    %v477 = vmul.f32 %v476, 1.442695
    %v478 = vpow.pop %v477
    %v479 = vadd.f32 %v478, 1.0
    %v480 = vrcp.pop %v479
    %v481 = vmul.f32 1.0, %v480
    %v482 = vmul.f32 %v481, 2.0
    %v483 = vsub.f32 %v482, 1.0
    %v484 = vsel %vm155, %v483, %v481
    %v485 = vmul.f32 %v484, %v389
    %487 = vrot.lane.b32.xlu0 %v484, 64
    %v488 = vpop.permute.xlu0 %487
    %v490 = vmul.f32 %v484, %v488
    %492 = vrot.lane.b32.xlu0 %v490, 32
    %v493 = vpop.permute.xlu0 %492
    %v495 = vadd.f32 %v485, %v493
    %v496 = vtanh.pop %v495
    %498 = vrot.lane.b32.xlu0 %v496, 64
    %v499 = vpop.permute.xlu0 %498
    %v501 = vmul.f32 %v484, %v499
    %503 = vrot.lane.b32.xlu0 %v501, 48
    %v504 = vpop.permute.xlu0 %503
    %v506 = vsel %vm69, %v55, %v504
    %v508 = vsel %vm77, %v506, 0
    %510 = vmatprep.subr.mxu0 0.0
    %511 = vmatpush1.msra.mxu0 %v62
    %512 = vmatprep.subr.mxu0 0.0
    %513 = vmatpush1.msra.mxu0 %v63
    %514 = vmatprep.subr.mxu0 0.0
    %515 = vmatpush1.msra.mxu0 %v64
    %516 = vmatprep.subr.mxu0 0.0
    %517 = vmatpush1.msra.mxu0 %v65
    %518 = vmatprep.subr.mxu0 0.0
    %519 = vmatpush1.msra.mxu0 %v66
    %520 = vmatprep.subr.mxu0 0.0
    %521 = vmatpush1.msra.mxu0 %v67
    %522 = vmatprep.subr.mxu0 0.0
    %523 = vmatpush1.msra.mxu0 0.0
    %524 = vmatprep.subr.mxu0 0.0
    %525 = vmatpush1.msra.mxu0 0.0
    %526 = vmatprep.subr.mxu0 0.0
    %527 = vmatpush1.msra.mxu0 0.0
    %528 = vmatprep.subr.mxu0 0.0
    %529 = vmatpush1.msra.mxu0 0.0
    %530 = vmatprep.subr.mxu0 0.0
    %531 = vmatpush1.msra.mxu0 0.0
    %532 = vmatprep.subr.mxu0 0.0
    %533 = vmatpush1.msra.mxu0 0.0
    %534 = vmatprep.subr.mxu0 0.0
    %535 = vmatpush1.msra.mxu0 0.0
    %536 = vmatprep.subr.mxu0 0.0
    %537 = vmatpush1.msra.mxu0 0.0
    %538 = vmatprep.subr.mxu0 0.0
    %539 = vmatpush1.msra.mxu0 0.0
    %540 = vmatprep.subr.mxu0 0.0
    %541 = vmatpush1.msra.mxu0 0.0
    %542 = vmatprep.subr.mxu0 0.0
    %543 = vmatpush1.msra.mxu0 0.0
    %544 = vmatprep.subr.mxu0 0.0
    %545 = vmatpush1.msra.mxu0 0.0
    %546 = vmatprep.subr.mxu0 0.0
    %547 = vmatpush1.msra.mxu0 0.0
    %548 = vmatprep.subr.mxu0 0.0
    %549 = vmatpush1.msra.mxu0 0.0
    %550 = vmatprep.subr.mxu0 0.0
    %551 = vmatpush1.msra.mxu0 0.0
    %552 = vmatprep.subr.mxu0 0.0
    %553 = vmatpush1.msra.mxu0 0.0
    %554 = vmatprep.subr.mxu0 0.0
    %555 = vmatpush1.msra.mxu0 0.0
    %556 = vmatprep.subr.mxu0 0.0
    %557 = vmatpush1.msra.mxu0 0.0
    %558 = vmatprep.subr.mxu0 0.0
    %559 = vmatpush1.msra.mxu0 0.0
    %560 = vmatprep.subr.mxu0 0.0
    %561 = vmatpush1.msra.mxu0 0.0
    %562 = vmatprep.subr.mxu0 0.0
    %563 = vmatpush1.msra.mxu0 0.0
    %564 = vmatprep.subr.mxu0 0.0
    %565 = vmatpush1.msra.mxu0 0.0
    %566 = vmatprep.subr.mxu0 0.0
    %567 = vmatpush1.msra.mxu0 0.0
    %568 = vmatprep.subr.mxu0 0.0
    %569 = vmatpush1.msra.mxu0 0.0
    %570 = vmatprep.subr.mxu0 0.0
    %571 = vmatpush1.msra.mxu0 0.0
    %572 = vmatprep.subr.mxu0 0.0
    %573 = vmatpush1.msra.mxu0 0.0
    %574 = vmatprep.mubr.f32.mxu0 0.0
    %575 = vmatmul.mubr.f32.gmra.mrb[0].mxu0 %v508
    %v576 = vpop.f32.mrb[0].mxu0
    %v577 = vadd.f32 %v75, %v576
    %v578 = vpop.f32.mrb[0].mxu0
    %579 = vdwg.mxu0
    %v580 = vmul.f32 %v577, 2.0
    %v581 = vsel %vm155, %v580, %v577
    %v582 = vxor.u32 %v581, 2147483648
    %v583 = vmul.f32 %v582, 1.442695
    %v584 = vpow.pop %v583
    %v585 = vadd.f32 %v584, 1.0
    %v586 = vrcp.pop %v585
    %v587 = vmul.f32 1.0, %v586
    %v588 = vmul.f32 %v587, 2.0
    %v589 = vsub.f32 %v588, 1.0
    %v590 = vsel %vm155, %v589, %v587
    %v591 = vmul.f32 %v590, %v495
    %593 = vrot.lane.b32.xlu0 %v590, 64
    %v594 = vpop.permute.xlu0 %593
    %v596 = vmul.f32 %v590, %v594
    %598 = vrot.lane.b32.xlu0 %v596, 32
    %v599 = vpop.permute.xlu0 %598
    %v601 = vadd.f32 %v591, %v599
    %v602 = vtanh.pop %v601
    %604 = vrot.lane.b32.xlu0 %v602, 64
    %v605 = vpop.permute.xlu0 %604
    %v607 = vmul.f32 %v590, %v605
    %609 = vrot.lane.b32.xlu0 %v607, 48
    %v610 = vpop.permute.xlu0 %609
    %v612 = vsel %vm69, %v57, %v610
    %v614 = vsel %vm77, %v612, 0
    %616 = vmatprep.subr.mxu0 0.0
    %617 = vmatpush1.msra.mxu0 %v62
    %618 = vmatprep.subr.mxu0 0.0
    %619 = vmatpush1.msra.mxu0 %v63
    %620 = vmatprep.subr.mxu0 0.0
    %621 = vmatpush1.msra.mxu0 %v64
    %622 = vmatprep.subr.mxu0 0.0
    %623 = vmatpush1.msra.mxu0 %v65
    %624 = vmatprep.subr.mxu0 0.0
    %625 = vmatpush1.msra.mxu0 %v66
    %626 = vmatprep.subr.mxu0 0.0
    %627 = vmatpush1.msra.mxu0 %v67
    %628 = vmatprep.subr.mxu0 0.0
    %629 = vmatpush1.msra.mxu0 0.0
    %630 = vmatprep.subr.mxu0 0.0
    %631 = vmatpush1.msra.mxu0 0.0
    %632 = vmatprep.subr.mxu0 0.0
    %633 = vmatpush1.msra.mxu0 0.0
    %634 = vmatprep.subr.mxu0 0.0
    %635 = vmatpush1.msra.mxu0 0.0
    %636 = vmatprep.subr.mxu0 0.0
    %637 = vmatpush1.msra.mxu0 0.0
    %638 = vmatprep.subr.mxu0 0.0
    %639 = vmatpush1.msra.mxu0 0.0
    %640 = vmatprep.subr.mxu0 0.0
    %641 = vmatpush1.msra.mxu0 0.0
    %642 = vmatprep.subr.mxu0 0.0
    %643 = vmatpush1.msra.mxu0 0.0
    %644 = vmatprep.subr.mxu0 0.0
    %645 = vmatpush1.msra.mxu0 0.0
    %646 = vmatprep.subr.mxu0 0.0
    %647 = vmatpush1.msra.mxu0 0.0
    %648 = vmatprep.subr.mxu0 0.0
    %649 = vmatpush1.msra.mxu0 0.0
    %650 = vmatprep.subr.mxu0 0.0
    %651 = vmatpush1.msra.mxu0 0.0
    %652 = vmatprep.subr.mxu0 0.0
    %653 = vmatpush1.msra.mxu0 0.0
    %654 = vmatprep.subr.mxu0 0.0
    %655 = vmatpush1.msra.mxu0 0.0
    %656 = vmatprep.subr.mxu0 0.0
    %657 = vmatpush1.msra.mxu0 0.0
    %658 = vmatprep.subr.mxu0 0.0
    %659 = vmatpush1.msra.mxu0 0.0
    %660 = vmatprep.subr.mxu0 0.0
    %661 = vmatpush1.msra.mxu0 0.0
    %662 = vmatprep.subr.mxu0 0.0
    %663 = vmatpush1.msra.mxu0 0.0
    %664 = vmatprep.subr.mxu0 0.0
    %665 = vmatpush1.msra.mxu0 0.0
    %666 = vmatprep.subr.mxu0 0.0
    %667 = vmatpush1.msra.mxu0 0.0
    %668 = vmatprep.subr.mxu0 0.0
    %669 = vmatpush1.msra.mxu0 0.0
    %670 = vmatprep.subr.mxu0 0.0
    %671 = vmatpush1.msra.mxu0 0.0
    %672 = vmatprep.subr.mxu0 0.0
    %673 = vmatpush1.msra.mxu0 0.0
    %674 = vmatprep.subr.mxu0 0.0
    %675 = vmatpush1.msra.mxu0 0.0
    %676 = vmatprep.subr.mxu0 0.0
    %677 = vmatpush1.msra.mxu0 0.0
    %678 = vmatprep.subr.mxu0 0.0
    %679 = vmatpush1.msra.mxu0 0.0
    %680 = vmatprep.mubr.f32.mxu0 0.0
    %681 = vmatmul.mubr.f32.gmra.mrb[0].mxu0 %v614
    %v682 = vpop.f32.mrb[0].mxu0
    %v683 = vadd.f32 %v75, %v682
    %v684 = vpop.f32.mrb[0].mxu0
    %685 = vdwg.mxu0
    %v686 = vmul.f32 %v683, 2.0
    %v687 = vsel %vm155, %v686, %v683
    %v688 = vxor.u32 %v687, 2147483648
    %v689 = vmul.f32 %v688, 1.442695
    %v690 = vpow.pop %v689
    %v691 = vadd.f32 %v690, 1.0
    %v692 = vrcp.pop %v691
    %v693 = vmul.f32 1.0, %v692
    %v694 = vmul.f32 %v693, 2.0
    %v695 = vsub.f32 %v694, 1.0
    %v696 = vsel %vm155, %v695, %v693
    %v697 = vmul.f32 %v696, %v601
    %699 = vrot.lane.b32.xlu0 %v696, 64
    %v700 = vpop.permute.xlu0 %699
    %v702 = vmul.f32 %v696, %v700
    %704 = vrot.lane.b32.xlu0 %v702, 32
    %v705 = vpop.permute.xlu0 %704
    %v707 = vadd.f32 %v697, %v705
    %v708 = vtanh.pop %v707
    %710 = vrot.lane.b32.xlu0 %v708, 64
    %v711 = vpop.permute.xlu0 %710
    %v713 = vmul.f32 %v696, %v711
    %715 = vrot.lane.b32.xlu0 %v713, 48
    %v716 = vpop.permute.xlu0 %715
    %v718 = vsel %vm69, %v59, %v716
    %v720 = vsel %vm77, %v718, 0
    %722 = vmatprep.subr.mxu0 0.0
    %723 = vmatpush1.msra.mxu0 %v62
    %724 = vmatprep.subr.mxu0 0.0
    %725 = vmatpush1.msra.mxu0 %v63
    %726 = vmatprep.subr.mxu0 0.0
    %727 = vmatpush1.msra.mxu0 %v64
    %728 = vmatprep.subr.mxu0 0.0
    %729 = vmatpush1.msra.mxu0 %v65
    %730 = vmatprep.subr.mxu0 0.0
    %731 = vmatpush1.msra.mxu0 %v66
    %732 = vmatprep.subr.mxu0 0.0
    %733 = vmatpush1.msra.mxu0 %v67
    %734 = vmatprep.subr.mxu0 0.0
    %735 = vmatpush1.msra.mxu0 0.0
    %736 = vmatprep.subr.mxu0 0.0
    %737 = vmatpush1.msra.mxu0 0.0
    %738 = vmatprep.subr.mxu0 0.0
    %739 = vmatpush1.msra.mxu0 0.0
    %740 = vmatprep.subr.mxu0 0.0
    %741 = vmatpush1.msra.mxu0 0.0
    %742 = vmatprep.subr.mxu0 0.0
    %743 = vmatpush1.msra.mxu0 0.0
    %744 = vmatprep.subr.mxu0 0.0
    %745 = vmatpush1.msra.mxu0 0.0
    %746 = vmatprep.subr.mxu0 0.0
    %747 = vmatpush1.msra.mxu0 0.0
    %748 = vmatprep.subr.mxu0 0.0
    %749 = vmatpush1.msra.mxu0 0.0
    %750 = vmatprep.subr.mxu0 0.0
    %751 = vmatpush1.msra.mxu0 0.0
    %752 = vmatprep.subr.mxu0 0.0
    %753 = vmatpush1.msra.mxu0 0.0
    %754 = vmatprep.subr.mxu0 0.0
    %755 = vmatpush1.msra.mxu0 0.0
    %756 = vmatprep.subr.mxu0 0.0
    %757 = vmatpush1.msra.mxu0 0.0
    %758 = vmatprep.subr.mxu0 0.0
    %759 = vmatpush1.msra.mxu0 0.0
    %760 = vmatprep.subr.mxu0 0.0
    %761 = vmatpush1.msra.mxu0 0.0
    %762 = vmatprep.subr.mxu0 0.0
    %763 = vmatpush1.msra.mxu0 0.0
    %764 = vmatprep.subr.mxu0 0.0
    %765 = vmatpush1.msra.mxu0 0.0
    %766 = vmatprep.subr.mxu0 0.0
    %767 = vmatpush1.msra.mxu0 0.0
    %768 = vmatprep.subr.mxu0 0.0
    %769 = vmatpush1.msra.mxu0 0.0
    %770 = vmatprep.subr.mxu0 0.0
    %771 = vmatpush1.msra.mxu0 0.0
    %772 = vmatprep.subr.mxu0 0.0
    %773 = vmatpush1.msra.mxu0 0.0
    %774 = vmatprep.subr.mxu0 0.0
    %775 = vmatpush1.msra.mxu0 0.0
    %776 = vmatprep.subr.mxu0 0.0
    %777 = vmatpush1.msra.mxu0 0.0
    %778 = vmatprep.subr.mxu0 0.0
    %779 = vmatpush1.msra.mxu0 0.0
    %780 = vmatprep.subr.mxu0 0.0
    %781 = vmatpush1.msra.mxu0 0.0
    %782 = vmatprep.subr.mxu0 0.0
    %783 = vmatpush1.msra.mxu0 0.0
    %784 = vmatprep.subr.mxu0 0.0
    %785 = vmatpush1.msra.mxu0 0.0
    %786 = vmatprep.mubr.f32.mxu0 0.0
    %787 = vmatmul.mubr.f32.gmra.mrb[0].mxu0 %v720
    %v788 = vpop.f32.mrb[0].mxu0
    %v789 = vadd.f32 %v75, %v788
    %v790 = vpop.f32.mrb[0].mxu0
    %791 = vdwg.mxu0
    %v792 = vmul.f32 %v789, 2.0
    %v793 = vsel %vm155, %v792, %v789
    %v794 = vxor.u32 %v793, 2147483648
    %v795 = vmul.f32 %v794, 1.442695
    %v796 = vpow.pop %v795
    %v797 = vadd.f32 %v796, 1.0
    %v798 = vrcp.pop %v797
    %v799 = vmul.f32 1.0, %v798
    %v800 = vmul.f32 %v799, 2.0
    %v801 = vsub.f32 %v800, 1.0
    %v802 = vsel %vm155, %v801, %v799
    %v803 = vmul.f32 %v802, %v707
    %805 = vrot.lane.b32.xlu0 %v802, 64
    %v806 = vpop.permute.xlu0 %805
    %v808 = vmul.f32 %v802, %v806
    %810 = vrot.lane.b32.xlu0 %v808, 32
    %v811 = vpop.permute.xlu0 %810
    %v813 = vadd.f32 %v803, %v811
    %v814 = vtanh.pop %v813
    %816 = vrot.lane.b32.xlu0 %v814, 64
    %v817 = vpop.permute.xlu0 %816
    %v819 = vmul.f32 %v802, %v817
    %821 = vrot.lane.b32.xlu0 %v819, 48
    %v822 = vpop.permute.xlu0 %821
    %v824 = vsel %vm69, %v61, %v822
    %v826 = vsel %vm77, %v824, 0
    %828 = vmatprep.subr.mxu0 0.0
    %829 = vmatpush1.msra.mxu0 %v62
    %830 = vmatprep.subr.mxu0 0.0
    %831 = vmatpush1.msra.mxu0 %v63
    %832 = vmatprep.subr.mxu0 0.0
    %833 = vmatpush1.msra.mxu0 %v64
    %834 = vmatprep.subr.mxu0 0.0
    %835 = vmatpush1.msra.mxu0 %v65
    %836 = vmatprep.subr.mxu0 0.0
    %837 = vmatpush1.msra.mxu0 %v66
    %838 = vmatprep.subr.mxu0 0.0
    %839 = vmatpush1.msra.mxu0 %v67
    %840 = vmatprep.subr.mxu0 0.0
    %841 = vmatpush1.msra.mxu0 0.0
    %842 = vmatprep.subr.mxu0 0.0
    %843 = vmatpush1.msra.mxu0 0.0
    %844 = vmatprep.subr.mxu0 0.0
    %845 = vmatpush1.msra.mxu0 0.0
    %846 = vmatprep.subr.mxu0 0.0
    %847 = vmatpush1.msra.mxu0 0.0
    %848 = vmatprep.subr.mxu0 0.0
    %849 = vmatpush1.msra.mxu0 0.0
    %850 = vmatprep.subr.mxu0 0.0
    %851 = vmatpush1.msra.mxu0 0.0
    %852 = vmatprep.subr.mxu0 0.0
    %853 = vmatpush1.msra.mxu0 0.0
    %854 = vmatprep.subr.mxu0 0.0
    %855 = vmatpush1.msra.mxu0 0.0
    %856 = vmatprep.subr.mxu0 0.0
    %857 = vmatpush1.msra.mxu0 0.0
    %858 = vmatprep.subr.mxu0 0.0
    %859 = vmatpush1.msra.mxu0 0.0
    %860 = vmatprep.subr.mxu0 0.0
    %861 = vmatpush1.msra.mxu0 0.0
    %862 = vmatprep.subr.mxu0 0.0
    %863 = vmatpush1.msra.mxu0 0.0
    %864 = vmatprep.subr.mxu0 0.0
    %865 = vmatpush1.msra.mxu0 0.0
    %866 = vmatprep.subr.mxu0 0.0
    %867 = vmatpush1.msra.mxu0 0.0
    %868 = vmatprep.subr.mxu0 0.0
    %869 = vmatpush1.msra.mxu0 0.0
    %870 = vmatprep.subr.mxu0 0.0
    %871 = vmatpush1.msra.mxu0 0.0
    %872 = vmatprep.subr.mxu0 0.0
    %873 = vmatpush1.msra.mxu0 0.0
    %874 = vmatprep.subr.mxu0 0.0
    %875 = vmatpush1.msra.mxu0 0.0
    %876 = vmatprep.subr.mxu0 0.0
    %877 = vmatpush1.msra.mxu0 0.0
    %878 = vmatprep.subr.mxu0 0.0
    %879 = vmatpush1.msra.mxu0 0.0
    %880 = vmatprep.subr.mxu0 0.0
    %881 = vmatpush1.msra.mxu0 0.0
    %882 = vmatprep.subr.mxu0 0.0
    %883 = vmatpush1.msra.mxu0 0.0
    %884 = vmatprep.subr.mxu0 0.0
    %885 = vmatpush1.msra.mxu0 0.0
    %886 = vmatprep.subr.mxu0 0.0
    %887 = vmatpush1.msra.mxu0 0.0
    %888 = vmatprep.subr.mxu0 0.0
    %889 = vmatpush1.msra.mxu0 0.0
    %890 = vmatprep.subr.mxu0 0.0
    %891 = vmatpush1.msra.mxu0 0.0
    %892 = vmatprep.mubr.f32.mxu0 0.0
    %893 = vmatmul.mubr.f32.gmra.mrb[0].mxu0 %v826
    %v894 = vpop.f32.mrb[0].mxu0
    %v895 = vadd.f32 %v75, %v894
    %v896 = vpop.f32.mrb[0].mxu0
    %897 = vdwg.mxu0
    %v898 = vmul.f32 %v895, 2.0
    %v899 = vsel %vm155, %v898, %v895
    %v900 = vxor.u32 %v899, 2147483648
    %v901 = vmul.f32 %v900, 1.442695
    %v902 = vpow.pop %v901
    %v903 = vadd.f32 %v902, 1.0
    %v904 = vrcp.pop %v903
    %v905 = vmul.f32 1.0, %v904
    %v906 = vmul.f32 %v905, 2.0
    %v907 = vsub.f32 %v906, 1.0
    %v908 = vsel %vm155, %v907, %v905
    %v909 = vmul.f32 %v908, %v813
    %911 = vrot.lane.b32.xlu0 %v908, 64
    %v912 = vpop.permute.xlu0 %911
    %v914 = vmul.f32 %v908, %v912
    %916 = vrot.lane.b32.xlu0 %v914, 32
    %v917 = vpop.permute.xlu0 %916
    %v919 = vadd.f32 %v909, %v917
    %v920 = vtanh.pop %v919
    %922 = vrot.lane.b32.xlu0 %v920, 64
    %v923 = vpop.permute.xlu0 %922
    %v925 = vmul.f32 %v908, %v923
    %v926 = vld [vmem:[%s3] sm:$0xff]
    %v927 = vld [vmem:[%s3 + $0x8] sm:$0xff]
    %v928 = vld [vmem:[%s3 + $0x10] sm:$0xff]
    %v929 = vld [vmem:[%s3 + $0x18] sm:$0xff]
    %v930 = vld [vmem:[%s3 + $0x20] sm:$0xff]
    %v931 = vld [vmem:[%s3 + $0x28] sm:$0xff]
    %v932 = vld [vmem:[%s3 + $0x30] sm:$0xff]
    %v933 = vld [vmem:[%s3 + $0x38] sm:$0xff]
    %v934 = vld [vmem:[%s4] sm:$0x1]
    %935 = vrot.lane.b32.xlu0 %v183, 32
    %v936 = vpop.permute.xlu0 %935
    %vm938 = vcmask 261120
    %v939 = vsel %vm938, %v936, 0.0
    %v941 = vlaneseq
    %v942 = vshrl.u32 %v941, 7
    %v943 = vsub.s32 0, %v942
    %v944 = vrot.slane %v934, %v943
    %vm946 = vcmask 523264
    %v948 = vsel %vm946, %v939, 0
    %950 = vmatprep.subr.mxu0 0.0
    %951 = vmatpush1.msra.mxu0 %v926
    %952 = vmatprep.subr.mxu0 0.0
    %953 = vmatpush1.msra.mxu0 %v927
    %954 = vmatprep.subr.mxu0 0.0
    %955 = vmatpush1.msra.mxu0 %v928
    %956 = vmatprep.subr.mxu0 0.0
    %957 = vmatpush1.msra.mxu0 %v929
    %958 = vmatprep.subr.mxu0 0.0
    %959 = vmatpush1.msra.mxu0 %v930
    %960 = vmatprep.subr.mxu0 0.0
    %961 = vmatpush1.msra.mxu0 %v931
    %962 = vmatprep.subr.mxu0 0.0
    %963 = vmatpush1.msra.mxu0 %v932
    %964 = vmatprep.subr.mxu0 0.0
    %965 = vmatpush1.msra.mxu0 %v933
    %966 = vmatprep.subr.mxu0 0.0
    %967 = vmatpush1.msra.mxu0 0.0
    %968 = vmatprep.subr.mxu0 0.0
    %969 = vmatpush1.msra.mxu0 0.0
    %970 = vmatprep.subr.mxu0 0.0
    %971 = vmatpush1.msra.mxu0 0.0
    %972 = vmatprep.subr.mxu0 0.0
    %973 = vmatpush1.msra.mxu0 0.0
    %974 = vmatprep.subr.mxu0 0.0
    %975 = vmatpush1.msra.mxu0 0.0
    %976 = vmatprep.subr.mxu0 0.0
    %977 = vmatpush1.msra.mxu0 0.0
    %978 = vmatprep.subr.mxu0 0.0
    %979 = vmatpush1.msra.mxu0 0.0
    %980 = vmatprep.subr.mxu0 0.0
    %981 = vmatpush1.msra.mxu0 0.0
    %982 = vmatprep.subr.mxu0 0.0
    %983 = vmatpush1.msra.mxu0 0.0
    %984 = vmatprep.subr.mxu0 0.0
    %985 = vmatpush1.msra.mxu0 0.0
    %986 = vmatprep.subr.mxu0 0.0
    %987 = vmatpush1.msra.mxu0 0.0
    %988 = vmatprep.subr.mxu0 0.0
    %989 = vmatpush1.msra.mxu0 0.0
    %990 = vmatprep.subr.mxu0 0.0
    %991 = vmatpush1.msra.mxu0 0.0
    %992 = vmatprep.subr.mxu0 0.0
    %993 = vmatpush1.msra.mxu0 0.0
    %994 = vmatprep.subr.mxu0 0.0
    %995 = vmatpush1.msra.mxu0 0.0
    %996 = vmatprep.subr.mxu0 0.0
    %997 = vmatpush1.msra.mxu0 0.0
    %998 = vmatprep.subr.mxu0 0.0
    %999 = vmatpush1.msra.mxu0 0.0
    %1000 = vmatprep.subr.mxu0 0.0
    %1001 = vmatpush1.msra.mxu0 0.0
    %1002 = vmatprep.subr.mxu0 0.0
    %1003 = vmatpush1.msra.mxu0 0.0
    %1004 = vmatprep.subr.mxu0 0.0
    %1005 = vmatpush1.msra.mxu0 0.0
    %1006 = vmatprep.subr.mxu0 0.0
    %1007 = vmatpush1.msra.mxu0 0.0
    %1008 = vmatprep.subr.mxu0 0.0
    %1009 = vmatpush1.msra.mxu0 0.0
    %1010 = vmatprep.subr.mxu0 0.0
    %1011 = vmatpush1.msra.mxu0 0.0
    %1012 = vmatprep.subr.mxu0 0.0
    %1013 = vmatpush1.msra.mxu0 0.0
    %1014 = vmatprep.mubr.f32.mxu0 0.0
    %1015 = vmatmul.mubr.f32.gmra.mrb[0].mxu0 %v948
    %v1016 = vpop.f32.mrb[0].mxu0
    %v1017 = vadd.f32 %v944, %v1016
    %v1018 = vpop.f32.mrb[0].mxu0
    %1019 = vdwg.mxu0
    %v1020 = vmul.f32 %v1017, 2.0
    %v1021 = vsel %vm155, %v1020, %v1017
    %v1022 = vxor.u32 %v1021, 2147483648
    %v1023 = vmul.f32 %v1022, 1.442695
    %v1024 = vpow.pop %v1023
    %v1025 = vadd.f32 %v1024, 1.0
    %v1026 = vrcp.pop %v1025
    %v1027 = vmul.f32 1.0, %v1026
    %v1028 = vmul.f32 %v1027, 2.0
    %v1029 = vsub.f32 %v1028, 1.0
    %v1030 = vsel %vm155, %v1029, %v1027
    %v1031 = vmul.f32 %v1030, 0.0
    %1033 = vrot.lane.b32.xlu0 %v1030, 64
    %v1034 = vpop.permute.xlu0 %1033
    %v1036 = vmul.f32 %v1030, %v1034
    %1038 = vrot.lane.b32.xlu0 %v1036, 32
    %v1039 = vpop.permute.xlu0 %1038
    %v1041 = vadd.f32 %v1031, %v1039
    %v1042 = vtanh.pop %v1041
    %1044 = vrot.lane.b32.xlu0 %v1042, 64
    %v1045 = vpop.permute.xlu0 %1044
    %v1047 = vmul.f32 %v1030, %v1045
    %1048 = vrot.lane.b32.xlu0 %v289, 32
    %v1049 = vpop.permute.xlu0 %1048
    %1052 = vrot.lane.b32.xlu0 %v1047, 64
    %v1053 = vpop.permute.xlu0 %1052
    %v1055 = vsel %vm938, %v1049, %v1053
    %v1057 = vsel %vm946, %v1055, 0
    %1059 = vmatprep.subr.mxu0 0.0
    %1060 = vmatpush1.msra.mxu0 %v926
    %1061 = vmatprep.subr.mxu0 0.0
    %1062 = vmatpush1.msra.mxu0 %v927
    %1063 = vmatprep.subr.mxu0 0.0
    %1064 = vmatpush1.msra.mxu0 %v928
    %1065 = vmatprep.subr.mxu0 0.0
    %1066 = vmatpush1.msra.mxu0 %v929
    %1067 = vmatprep.subr.mxu0 0.0
    %1068 = vmatpush1.msra.mxu0 %v930
    %1069 = vmatprep.subr.mxu0 0.0
    %1070 = vmatpush1.msra.mxu0 %v931
    %1071 = vmatprep.subr.mxu0 0.0
    %1072 = vmatpush1.msra.mxu0 %v932
    %1073 = vmatprep.subr.mxu0 0.0
    %1074 = vmatpush1.msra.mxu0 %v933
    %1075 = vmatprep.subr.mxu0 0.0
    %1076 = vmatpush1.msra.mxu0 0.0
    %1077 = vmatprep.subr.mxu0 0.0
    %1078 = vmatpush1.msra.mxu0 0.0
    %1079 = vmatprep.subr.mxu0 0.0
    %1080 = vmatpush1.msra.mxu0 0.0
    %1081 = vmatprep.subr.mxu0 0.0
    %1082 = vmatpush1.msra.mxu0 0.0
    %1083 = vmatprep.subr.mxu0 0.0
    %1084 = vmatpush1.msra.mxu0 0.0
    %1085 = vmatprep.subr.mxu0 0.0
    %1086 = vmatpush1.msra.mxu0 0.0
    %1087 = vmatprep.subr.mxu0 0.0
    %1088 = vmatpush1.msra.mxu0 0.0
    %1089 = vmatprep.subr.mxu0 0.0
    %1090 = vmatpush1.msra.mxu0 0.0
    %1091 = vmatprep.subr.mxu0 0.0
    %1092 = vmatpush1.msra.mxu0 0.0
    %1093 = vmatprep.subr.mxu0 0.0
    %1094 = vmatpush1.msra.mxu0 0.0
    %1095 = vmatprep.subr.mxu0 0.0
    %1096 = vmatpush1.msra.mxu0 0.0
    %1097 = vmatprep.subr.mxu0 0.0
    %1098 = vmatpush1.msra.mxu0 0.0
    %1099 = vmatprep.subr.mxu0 0.0
    %1100 = vmatpush1.msra.mxu0 0.0
    %1101 = vmatprep.subr.mxu0 0.0
    %1102 = vmatpush1.msra.mxu0 0.0
    %1103 = vmatprep.subr.mxu0 0.0
    %1104 = vmatpush1.msra.mxu0 0.0
    %1105 = vmatprep.subr.mxu0 0.0
    %1106 = vmatpush1.msra.mxu0 0.0
    %1107 = vmatprep.subr.mxu0 0.0
    %1108 = vmatpush1.msra.mxu0 0.0
    %1109 = vmatprep.subr.mxu0 0.0
    %1110 = vmatpush1.msra.mxu0 0.0
    %1111 = vmatprep.subr.mxu0 0.0
    %1112 = vmatpush1.msra.mxu0 0.0
    %1113 = vmatprep.subr.mxu0 0.0
    %1114 = vmatpush1.msra.mxu0 0.0
    %1115 = vmatprep.subr.mxu0 0.0
    %1116 = vmatpush1.msra.mxu0 0.0
    %1117 = vmatprep.subr.mxu0 0.0
    %1118 = vmatpush1.msra.mxu0 0.0
    %1119 = vmatprep.subr.mxu0 0.0
    %1120 = vmatpush1.msra.mxu0 0.0
    %1121 = vmatprep.subr.mxu0 0.0
    %1122 = vmatpush1.msra.mxu0 0.0
    %1123 = vmatprep.mubr.f32.mxu0 0.0
    %1124 = vmatmul.mubr.f32.gmra.mrb[0].mxu0 %v1057
    %v1125 = vpop.f32.mrb[0].mxu0
    %v1126 = vadd.f32 %v944, %v1125
    %v1127 = vpop.f32.mrb[0].mxu0
    %1128 = vdwg.mxu0
    %v1129 = vmul.f32 %v1126, 2.0
    %v1130 = vsel %vm155, %v1129, %v1126
    %v1131 = vxor.u32 %v1130, 2147483648
    %v1132 = vmul.f32 %v1131, 1.442695
    %v1133 = vpow.pop %v1132
    %v1134 = vadd.f32 %v1133, 1.0
    %v1135 = vrcp.pop %v1134
    %v1136 = vmul.f32 1.0, %v1135
    %v1137 = vmul.f32 %v1136, 2.0
    %v1138 = vsub.f32 %v1137, 1.0
    %v1139 = vsel %vm155, %v1138, %v1136
    %v1140 = vmul.f32 %v1139, %v1041
    %1142 = vrot.lane.b32.xlu0 %v1139, 64
    %v1143 = vpop.permute.xlu0 %1142
    %v1145 = vmul.f32 %v1139, %v1143
    %1147 = vrot.lane.b32.xlu0 %v1145, 32
    %v1148 = vpop.permute.xlu0 %1147
    %v1150 = vadd.f32 %v1140, %v1148
    %v1151 = vtanh.pop %v1150
    %1153 = vrot.lane.b32.xlu0 %v1151, 64
    %v1154 = vpop.permute.xlu0 %1153
    %v1156 = vmul.f32 %v1139, %v1154
    %1157 = vrot.lane.b32.xlu0 %v395, 32
    %v1158 = vpop.permute.xlu0 %1157
    %1161 = vrot.lane.b32.xlu0 %v1156, 64
    %v1162 = vpop.permute.xlu0 %1161
    %v1164 = vsel %vm938, %v1158, %v1162
    %v1166 = vsel %vm946, %v1164, 0
    %1168 = vmatprep.subr.mxu0 0.0
    %1169 = vmatpush1.msra.mxu0 %v926
    %1170 = vmatprep.subr.mxu0 0.0
    %1171 = vmatpush1.msra.mxu0 %v927
    %1172 = vmatprep.subr.mxu0 0.0
    %1173 = vmatpush1.msra.mxu0 %v928
    %1174 = vmatprep.subr.mxu0 0.0
    %1175 = vmatpush1.msra.mxu0 %v929
    %1176 = vmatprep.subr.mxu0 0.0
    %1177 = vmatpush1.msra.mxu0 %v930
    %1178 = vmatprep.subr.mxu0 0.0
    %1179 = vmatpush1.msra.mxu0 %v931
    %1180 = vmatprep.subr.mxu0 0.0
    %1181 = vmatpush1.msra.mxu0 %v932
    %1182 = vmatprep.subr.mxu0 0.0
    %1183 = vmatpush1.msra.mxu0 %v933
    %1184 = vmatprep.subr.mxu0 0.0
    %1185 = vmatpush1.msra.mxu0 0.0
    %1186 = vmatprep.subr.mxu0 0.0
    %1187 = vmatpush1.msra.mxu0 0.0
    %1188 = vmatprep.subr.mxu0 0.0
    %1189 = vmatpush1.msra.mxu0 0.0
    %1190 = vmatprep.subr.mxu0 0.0
    %1191 = vmatpush1.msra.mxu0 0.0
    %1192 = vmatprep.subr.mxu0 0.0
    %1193 = vmatpush1.msra.mxu0 0.0
    %1194 = vmatprep.subr.mxu0 0.0
    %1195 = vmatpush1.msra.mxu0 0.0
    %1196 = vmatprep.subr.mxu0 0.0
    %1197 = vmatpush1.msra.mxu0 0.0
    %1198 = vmatprep.subr.mxu0 0.0
    %1199 = vmatpush1.msra.mxu0 0.0
    %1200 = vmatprep.subr.mxu0 0.0
    %1201 = vmatpush1.msra.mxu0 0.0
    %1202 = vmatprep.subr.mxu0 0.0
    %1203 = vmatpush1.msra.mxu0 0.0
    %1204 = vmatprep.subr.mxu0 0.0
    %1205 = vmatpush1.msra.mxu0 0.0
    %1206 = vmatprep.subr.mxu0 0.0
    %1207 = vmatpush1.msra.mxu0 0.0
    %1208 = vmatprep.subr.mxu0 0.0
    %1209 = vmatpush1.msra.mxu0 0.0
    %1210 = vmatprep.subr.mxu0 0.0
    %1211 = vmatpush1.msra.mxu0 0.0
    %1212 = vmatprep.subr.mxu0 0.0
    %1213 = vmatpush1.msra.mxu0 0.0
    %1214 = vmatprep.subr.mxu0 0.0
    %1215 = vmatpush1.msra.mxu0 0.0
    %1216 = vmatprep.subr.mxu0 0.0
    %1217 = vmatpush1.msra.mxu0 0.0
    %1218 = vmatprep.subr.mxu0 0.0
    %1219 = vmatpush1.msra.mxu0 0.0
    %1220 = vmatprep.subr.mxu0 0.0
    %1221 = vmatpush1.msra.mxu0 0.0
    %1222 = vmatprep.subr.mxu0 0.0
    %1223 = vmatpush1.msra.mxu0 0.0
    %1224 = vmatprep.subr.mxu0 0.0
    %1225 = vmatpush1.msra.mxu0 0.0
    %1226 = vmatprep.subr.mxu0 0.0
    %1227 = vmatpush1.msra.mxu0 0.0
    %1228 = vmatprep.subr.mxu0 0.0
    %1229 = vmatpush1.msra.mxu0 0.0
    %1230 = vmatprep.subr.mxu0 0.0
    %1231 = vmatpush1.msra.mxu0 0.0
    %1232 = vmatprep.mubr.f32.mxu0 0.0
    %1233 = vmatmul.mubr.f32.gmra.mrb[0].mxu0 %v1166
    %v1234 = vpop.f32.mrb[0].mxu0
    %v1235 = vadd.f32 %v944, %v1234
    %v1236 = vpop.f32.mrb[0].mxu0
    %1237 = vdwg.mxu0
    %v1238 = vmul.f32 %v1235, 2.0
    %v1239 = vsel %vm155, %v1238, %v1235
    %v1240 = vxor.u32 %v1239, 2147483648
    %v1241 = vmul.f32 %v1240, 1.442695
    %v1242 = vpow.pop %v1241
    %v1243 = vadd.f32 %v1242, 1.0
    %v1244 = vrcp.pop %v1243
    %v1245 = vmul.f32 1.0, %v1244
    %v1246 = vmul.f32 %v1245, 2.0
    %v1247 = vsub.f32 %v1246, 1.0
    %v1248 = vsel %vm155, %v1247, %v1245
    %v1249 = vmul.f32 %v1248, %v1150
    %1251 = vrot.lane.b32.xlu0 %v1248, 64
    %v1252 = vpop.permute.xlu0 %1251
    %v1254 = vmul.f32 %v1248, %v1252
    %1256 = vrot.lane.b32.xlu0 %v1254, 32
    %v1257 = vpop.permute.xlu0 %1256
    %v1259 = vadd.f32 %v1249, %v1257
    %v1260 = vtanh.pop %v1259
    %1262 = vrot.lane.b32.xlu0 %v1260, 64
    %v1263 = vpop.permute.xlu0 %1262
    %v1265 = vmul.f32 %v1248, %v1263
    %1266 = vrot.lane.b32.xlu0 %v501, 32
    %v1267 = vpop.permute.xlu0 %1266
    %1270 = vrot.lane.b32.xlu0 %v1265, 64
    %v1271 = vpop.permute.xlu0 %1270
    %v1273 = vsel %vm938, %v1267, %v1271
    %v1275 = vsel %vm946, %v1273, 0
    %1277 = vmatprep.subr.mxu0 0.0
    %1278 = vmatpush1.msra.mxu0 %v926
    %1279 = vmatprep.subr.mxu0 0.0
    %1280 = vmatpush1.msra.mxu0 %v927
    %1281 = vmatprep.subr.mxu0 0.0
    %1282 = vmatpush1.msra.mxu0 %v928
    %1283 = vmatprep.subr.mxu0 0.0
    %1284 = vmatpush1.msra.mxu0 %v929
    %1285 = vmatprep.subr.mxu0 0.0
    %1286 = vmatpush1.msra.mxu0 %v930
    %1287 = vmatprep.subr.mxu0 0.0
    %1288 = vmatpush1.msra.mxu0 %v931
    %1289 = vmatprep.subr.mxu0 0.0
    %1290 = vmatpush1.msra.mxu0 %v932
    %1291 = vmatprep.subr.mxu0 0.0
    %1292 = vmatpush1.msra.mxu0 %v933
    %1293 = vmatprep.subr.mxu0 0.0
    %1294 = vmatpush1.msra.mxu0 0.0
    %1295 = vmatprep.subr.mxu0 0.0
    %1296 = vmatpush1.msra.mxu0 0.0
    %1297 = vmatprep.subr.mxu0 0.0
    %1298 = vmatpush1.msra.mxu0 0.0
    %1299 = vmatprep.subr.mxu0 0.0
    %1300 = vmatpush1.msra.mxu0 0.0
    %1301 = vmatprep.subr.mxu0 0.0
    %1302 = vmatpush1.msra.mxu0 0.0
    %1303 = vmatprep.subr.mxu0 0.0
    %1304 = vmatpush1.msra.mxu0 0.0
    %1305 = vmatprep.subr.mxu0 0.0
    %1306 = vmatpush1.msra.mxu0 0.0
    %1307 = vmatprep.subr.mxu0 0.0
    %1308 = vmatpush1.msra.mxu0 0.0
    %1309 = vmatprep.subr.mxu0 0.0
    %1310 = vmatpush1.msra.mxu0 0.0
    %1311 = vmatprep.subr.mxu0 0.0
    %1312 = vmatpush1.msra.mxu0 0.0
    %1313 = vmatprep.subr.mxu0 0.0
    %1314 = vmatpush1.msra.mxu0 0.0
    %1315 = vmatprep.subr.mxu0 0.0
    %1316 = vmatpush1.msra.mxu0 0.0
    %1317 = vmatprep.subr.mxu0 0.0
    %1318 = vmatpush1.msra.mxu0 0.0
    %1319 = vmatprep.subr.mxu0 0.0
    %1320 = vmatpush1.msra.mxu0 0.0
    %1321 = vmatprep.subr.mxu0 0.0
    %1322 = vmatpush1.msra.mxu0 0.0
    %1323 = vmatprep.subr.mxu0 0.0
    %1324 = vmatpush1.msra.mxu0 0.0
    %1325 = vmatprep.subr.mxu0 0.0
    %1326 = vmatpush1.msra.mxu0 0.0
    %1327 = vmatprep.subr.mxu0 0.0
    %1328 = vmatpush1.msra.mxu0 0.0
    %1329 = vmatprep.subr.mxu0 0.0
    %1330 = vmatpush1.msra.mxu0 0.0
    %1331 = vmatprep.subr.mxu0 0.0
    %1332 = vmatpush1.msra.mxu0 0.0
    %1333 = vmatprep.subr.mxu0 0.0
    %1334 = vmatpush1.msra.mxu0 0.0
    %1335 = vmatprep.subr.mxu0 0.0
    %1336 = vmatpush1.msra.mxu0 0.0
    %1337 = vmatprep.subr.mxu0 0.0
    %1338 = vmatpush1.msra.mxu0 0.0
    %1339 = vmatprep.subr.mxu0 0.0
    %1340 = vmatpush1.msra.mxu0 0.0
    %1341 = vmatprep.mubr.f32.mxu0 0.0
    %1342 = vmatmul.mubr.f32.gmra.mrb[0].mxu0 %v1275
    %v1343 = vpop.f32.mrb[0].mxu0
    %v1344 = vadd.f32 %v944, %v1343
    %v1345 = vpop.f32.mrb[0].mxu0
    %1346 = vdwg.mxu0
    %v1347 = vmul.f32 %v1344, 2.0
    %v1348 = vsel %vm155, %v1347, %v1344
    %v1349 = vxor.u32 %v1348, 2147483648
    %v1350 = vmul.f32 %v1349, 1.442695
    %v1351 = vpow.pop %v1350
    %v1352 = vadd.f32 %v1351, 1.0
    %v1353 = vrcp.pop %v1352
    %v1354 = vmul.f32 1.0, %v1353
    %v1355 = vmul.f32 %v1354, 2.0
    %v1356 = vsub.f32 %v1355, 1.0
    %v1357 = vsel %vm155, %v1356, %v1354
    %v1358 = vmul.f32 %v1357, %v1259
    %1360 = vrot.lane.b32.xlu0 %v1357, 64
    %v1361 = vpop.permute.xlu0 %1360
    %v1363 = vmul.f32 %v1357, %v1361
    %1365 = vrot.lane.b32.xlu0 %v1363, 32
    %v1366 = vpop.permute.xlu0 %1365
    %v1368 = vadd.f32 %v1358, %v1366
    %v1369 = vtanh.pop %v1368
    %1371 = vrot.lane.b32.xlu0 %v1369, 64
    %v1372 = vpop.permute.xlu0 %1371
    %v1374 = vmul.f32 %v1357, %v1372
    %1375 = vrot.lane.b32.xlu0 %v607, 32
    %v1376 = vpop.permute.xlu0 %1375
    %1379 = vrot.lane.b32.xlu0 %v1374, 64
    %v1380 = vpop.permute.xlu0 %1379
    %v1382 = vsel %vm938, %v1376, %v1380
    %v1384 = vsel %vm946, %v1382, 0
    %1386 = vmatprep.subr.mxu0 0.0
    %1387 = vmatpush1.msra.mxu0 %v926
    %1388 = vmatprep.subr.mxu0 0.0
    %1389 = vmatpush1.msra.mxu0 %v927
    %1390 = vmatprep.subr.mxu0 0.0
    %1391 = vmatpush1.msra.mxu0 %v928
    %1392 = vmatprep.subr.mxu0 0.0
    %1393 = vmatpush1.msra.mxu0 %v929
    %1394 = vmatprep.subr.mxu0 0.0
    %1395 = vmatpush1.msra.mxu0 %v930
    %1396 = vmatprep.subr.mxu0 0.0
    %1397 = vmatpush1.msra.mxu0 %v931
    %1398 = vmatprep.subr.mxu0 0.0
    %1399 = vmatpush1.msra.mxu0 %v932
    %1400 = vmatprep.subr.mxu0 0.0
    %1401 = vmatpush1.msra.mxu0 %v933
    %1402 = vmatprep.subr.mxu0 0.0
    %1403 = vmatpush1.msra.mxu0 0.0
    %1404 = vmatprep.subr.mxu0 0.0
    %1405 = vmatpush1.msra.mxu0 0.0
    %1406 = vmatprep.subr.mxu0 0.0
    %1407 = vmatpush1.msra.mxu0 0.0
    %1408 = vmatprep.subr.mxu0 0.0
    %1409 = vmatpush1.msra.mxu0 0.0
    %1410 = vmatprep.subr.mxu0 0.0
    %1411 = vmatpush1.msra.mxu0 0.0
    %1412 = vmatprep.subr.mxu0 0.0
    %1413 = vmatpush1.msra.mxu0 0.0
    %1414 = vmatprep.subr.mxu0 0.0
    %1415 = vmatpush1.msra.mxu0 0.0
    %1416 = vmatprep.subr.mxu0 0.0
    %1417 = vmatpush1.msra.mxu0 0.0
    %1418 = vmatprep.subr.mxu0 0.0
    %1419 = vmatpush1.msra.mxu0 0.0
    %1420 = vmatprep.subr.mxu0 0.0
    %1421 = vmatpush1.msra.mxu0 0.0
    %1422 = vmatprep.subr.mxu0 0.0
    %1423 = vmatpush1.msra.mxu0 0.0
    %1424 = vmatprep.subr.mxu0 0.0
    %1425 = vmatpush1.msra.mxu0 0.0
    %1426 = vmatprep.subr.mxu0 0.0
    %1427 = vmatpush1.msra.mxu0 0.0
    %1428 = vmatprep.subr.mxu0 0.0
    %1429 = vmatpush1.msra.mxu0 0.0
    %1430 = vmatprep.subr.mxu0 0.0
    %1431 = vmatpush1.msra.mxu0 0.0
    %1432 = vmatprep.subr.mxu0 0.0
    %1433 = vmatpush1.msra.mxu0 0.0
    %1434 = vmatprep.subr.mxu0 0.0
    %1435 = vmatpush1.msra.mxu0 0.0
    %1436 = vmatprep.subr.mxu0 0.0
    %1437 = vmatpush1.msra.mxu0 0.0
    %1438 = vmatprep.subr.mxu0 0.0
    %1439 = vmatpush1.msra.mxu0 0.0
    %1440 = vmatprep.subr.mxu0 0.0
    %1441 = vmatpush1.msra.mxu0 0.0
    %1442 = vmatprep.subr.mxu0 0.0
    %1443 = vmatpush1.msra.mxu0 0.0
    %1444 = vmatprep.subr.mxu0 0.0
    %1445 = vmatpush1.msra.mxu0 0.0
    %1446 = vmatprep.subr.mxu0 0.0
    %1447 = vmatpush1.msra.mxu0 0.0
    %1448 = vmatprep.subr.mxu0 0.0
    %1449 = vmatpush1.msra.mxu0 0.0
    %1450 = vmatprep.mubr.f32.mxu0 0.0
    %1451 = vmatmul.mubr.f32.gmra.mrb[0].mxu0 %v1384
    %v1452 = vpop.f32.mrb[0].mxu0
    %v1453 = vadd.f32 %v944, %v1452
    %v1454 = vpop.f32.mrb[0].mxu0
    %1455 = vdwg.mxu0
    %v1456 = vmul.f32 %v1453, 2.0
    %v1457 = vsel %vm155, %v1456, %v1453
    %v1458 = vxor.u32 %v1457, 2147483648
    %v1459 = vmul.f32 %v1458, 1.442695
    %v1460 = vpow.pop %v1459
    %v1461 = vadd.f32 %v1460, 1.0
    %v1462 = vrcp.pop %v1461
    %v1463 = vmul.f32 1.0, %v1462
    %v1464 = vmul.f32 %v1463, 2.0
    %v1465 = vsub.f32 %v1464, 1.0
    %v1466 = vsel %vm155, %v1465, %v1463
    %v1467 = vmul.f32 %v1466, %v1368
    %1469 = vrot.lane.b32.xlu0 %v1466, 64
    %v1470 = vpop.permute.xlu0 %1469
    %v1472 = vmul.f32 %v1466, %v1470
    %1474 = vrot.lane.b32.xlu0 %v1472, 32
    %v1475 = vpop.permute.xlu0 %1474
    %v1477 = vadd.f32 %v1467, %v1475
    %v1478 = vtanh.pop %v1477
    %1480 = vrot.lane.b32.xlu0 %v1478, 64
    %v1481 = vpop.permute.xlu0 %1480
    %v1483 = vmul.f32 %v1466, %v1481
    %1484 = vrot.lane.b32.xlu0 %v713, 32
    %v1485 = vpop.permute.xlu0 %1484
    %1488 = vrot.lane.b32.xlu0 %v1483, 64
    %v1489 = vpop.permute.xlu0 %1488
    %v1491 = vsel %vm938, %v1485, %v1489
    %v1493 = vsel %vm946, %v1491, 0
    %1495 = vmatprep.subr.mxu0 0.0
    %1496 = vmatpush1.msra.mxu0 %v926
    %1497 = vmatprep.subr.mxu0 0.0
    %1498 = vmatpush1.msra.mxu0 %v927
    %1499 = vmatprep.subr.mxu0 0.0
    %1500 = vmatpush1.msra.mxu0 %v928
    %1501 = vmatprep.subr.mxu0 0.0
    %1502 = vmatpush1.msra.mxu0 %v929
    %1503 = vmatprep.subr.mxu0 0.0
    %1504 = vmatpush1.msra.mxu0 %v930
    %1505 = vmatprep.subr.mxu0 0.0
    %1506 = vmatpush1.msra.mxu0 %v931
    %1507 = vmatprep.subr.mxu0 0.0
    %1508 = vmatpush1.msra.mxu0 %v932
    %1509 = vmatprep.subr.mxu0 0.0
    %1510 = vmatpush1.msra.mxu0 %v933
    %1511 = vmatprep.subr.mxu0 0.0
    %1512 = vmatpush1.msra.mxu0 0.0
    %1513 = vmatprep.subr.mxu0 0.0
    %1514 = vmatpush1.msra.mxu0 0.0
    %1515 = vmatprep.subr.mxu0 0.0
    %1516 = vmatpush1.msra.mxu0 0.0
    %1517 = vmatprep.subr.mxu0 0.0
    %1518 = vmatpush1.msra.mxu0 0.0
    %1519 = vmatprep.subr.mxu0 0.0
    %1520 = vmatpush1.msra.mxu0 0.0
    %1521 = vmatprep.subr.mxu0 0.0
    %1522 = vmatpush1.msra.mxu0 0.0
    %1523 = vmatprep.subr.mxu0 0.0
    %1524 = vmatpush1.msra.mxu0 0.0
    %1525 = vmatprep.subr.mxu0 0.0
    %1526 = vmatpush1.msra.mxu0 0.0
    %1527 = vmatprep.subr.mxu0 0.0
    %1528 = vmatpush1.msra.mxu0 0.0
    %1529 = vmatprep.subr.mxu0 0.0
    %1530 = vmatpush1.msra.mxu0 0.0
    %1531 = vmatprep.subr.mxu0 0.0
    %1532 = vmatpush1.msra.mxu0 0.0
    %1533 = vmatprep.subr.mxu0 0.0
    %1534 = vmatpush1.msra.mxu0 0.0
    %1535 = vmatprep.subr.mxu0 0.0
    %1536 = vmatpush1.msra.mxu0 0.0
    %1537 = vmatprep.subr.mxu0 0.0
    %1538 = vmatpush1.msra.mxu0 0.0
    %1539 = vmatprep.subr.mxu0 0.0
    %1540 = vmatpush1.msra.mxu0 0.0
    %1541 = vmatprep.subr.mxu0 0.0
    %1542 = vmatpush1.msra.mxu0 0.0
    %1543 = vmatprep.subr.mxu0 0.0
    %1544 = vmatpush1.msra.mxu0 0.0
    %1545 = vmatprep.subr.mxu0 0.0
    %1546 = vmatpush1.msra.mxu0 0.0
    %1547 = vmatprep.subr.mxu0 0.0
    %1548 = vmatpush1.msra.mxu0 0.0
    %1549 = vmatprep.subr.mxu0 0.0
    %1550 = vmatpush1.msra.mxu0 0.0
    %1551 = vmatprep.subr.mxu0 0.0
    %1552 = vmatpush1.msra.mxu0 0.0
    %1553 = vmatprep.subr.mxu0 0.0
    %1554 = vmatpush1.msra.mxu0 0.0
    %1555 = vmatprep.subr.mxu0 0.0
    %1556 = vmatpush1.msra.mxu0 0.0
    %1557 = vmatprep.subr.mxu0 0.0
    %1558 = vmatpush1.msra.mxu0 0.0
    %1559 = vmatprep.mubr.f32.mxu0 0.0
    %1560 = vmatmul.mubr.f32.gmra.mrb[0].mxu0 %v1493
    %v1561 = vpop.f32.mrb[0].mxu0
    %v1562 = vadd.f32 %v944, %v1561
    %v1563 = vpop.f32.mrb[0].mxu0
    %1564 = vdwg.mxu0
    %v1565 = vmul.f32 %v1562, 2.0
    %v1566 = vsel %vm155, %v1565, %v1562
    %v1567 = vxor.u32 %v1566, 2147483648
    %v1568 = vmul.f32 %v1567, 1.442695
    %v1569 = vpow.pop %v1568
    %v1570 = vadd.f32 %v1569, 1.0
    %v1571 = vrcp.pop %v1570
    %v1572 = vmul.f32 1.0, %v1571
    %v1573 = vmul.f32 %v1572, 2.0
    %v1574 = vsub.f32 %v1573, 1.0
    %v1575 = vsel %vm155, %v1574, %v1572
    %v1576 = vmul.f32 %v1575, %v1477
    %1578 = vrot.lane.b32.xlu0 %v1575, 64
    %v1579 = vpop.permute.xlu0 %1578
    %v1581 = vmul.f32 %v1575, %v1579
    %1583 = vrot.lane.b32.xlu0 %v1581, 32
    %v1584 = vpop.permute.xlu0 %1583
    %v1586 = vadd.f32 %v1576, %v1584
    %v1587 = vtanh.pop %v1586
    %1589 = vrot.lane.b32.xlu0 %v1587, 64
    %v1590 = vpop.permute.xlu0 %1589
    %v1592 = vmul.f32 %v1575, %v1590
    %1593 = vrot.lane.b32.xlu0 %v819, 32
    %v1594 = vpop.permute.xlu0 %1593
    %1597 = vrot.lane.b32.xlu0 %v1592, 64
    %v1598 = vpop.permute.xlu0 %1597
    %v1600 = vsel %vm938, %v1594, %v1598
    %v1602 = vsel %vm946, %v1600, 0
    %1604 = vmatprep.subr.mxu0 0.0
    %1605 = vmatpush1.msra.mxu0 %v926
    %1606 = vmatprep.subr.mxu0 0.0
    %1607 = vmatpush1.msra.mxu0 %v927
    %1608 = vmatprep.subr.mxu0 0.0
    %1609 = vmatpush1.msra.mxu0 %v928
    %1610 = vmatprep.subr.mxu0 0.0
    %1611 = vmatpush1.msra.mxu0 %v929
    %1612 = vmatprep.subr.mxu0 0.0
    %1613 = vmatpush1.msra.mxu0 %v930
    %1614 = vmatprep.subr.mxu0 0.0
    %1615 = vmatpush1.msra.mxu0 %v931
    %1616 = vmatprep.subr.mxu0 0.0
    %1617 = vmatpush1.msra.mxu0 %v932
    %1618 = vmatprep.subr.mxu0 0.0
    %1619 = vmatpush1.msra.mxu0 %v933
    %1620 = vmatprep.subr.mxu0 0.0
    %1621 = vmatpush1.msra.mxu0 0.0
    %1622 = vmatprep.subr.mxu0 0.0
    %1623 = vmatpush1.msra.mxu0 0.0
    %1624 = vmatprep.subr.mxu0 0.0
    %1625 = vmatpush1.msra.mxu0 0.0
    %1626 = vmatprep.subr.mxu0 0.0
    %1627 = vmatpush1.msra.mxu0 0.0
    %1628 = vmatprep.subr.mxu0 0.0
    %1629 = vmatpush1.msra.mxu0 0.0
    %1630 = vmatprep.subr.mxu0 0.0
    %1631 = vmatpush1.msra.mxu0 0.0
    %1632 = vmatprep.subr.mxu0 0.0
    %1633 = vmatpush1.msra.mxu0 0.0
    %1634 = vmatprep.subr.mxu0 0.0
    %1635 = vmatpush1.msra.mxu0 0.0
    %1636 = vmatprep.subr.mxu0 0.0
    %1637 = vmatpush1.msra.mxu0 0.0
    %1638 = vmatprep.subr.mxu0 0.0
    %1639 = vmatpush1.msra.mxu0 0.0
    %1640 = vmatprep.subr.mxu0 0.0
    %1641 = vmatpush1.msra.mxu0 0.0
    %1642 = vmatprep.subr.mxu0 0.0
    %1643 = vmatpush1.msra.mxu0 0.0
    %1644 = vmatprep.subr.mxu0 0.0
    %1645 = vmatpush1.msra.mxu0 0.0
    %1646 = vmatprep.subr.mxu0 0.0
    %1647 = vmatpush1.msra.mxu0 0.0
    %1648 = vmatprep.subr.mxu0 0.0
    %1649 = vmatpush1.msra.mxu0 0.0
    %1650 = vmatprep.subr.mxu0 0.0
    %1651 = vmatpush1.msra.mxu0 0.0
    %1652 = vmatprep.subr.mxu0 0.0
    %1653 = vmatpush1.msra.mxu0 0.0
    %1654 = vmatprep.subr.mxu0 0.0
    %1655 = vmatpush1.msra.mxu0 0.0
    %1656 = vmatprep.subr.mxu0 0.0
    %1657 = vmatpush1.msra.mxu0 0.0
    %1658 = vmatprep.subr.mxu0 0.0
    %1659 = vmatpush1.msra.mxu0 0.0
    %1660 = vmatprep.subr.mxu0 0.0
    %1661 = vmatpush1.msra.mxu0 0.0
    %1662 = vmatprep.subr.mxu0 0.0
    %1663 = vmatpush1.msra.mxu0 0.0
    %1664 = vmatprep.subr.mxu0 0.0
    %1665 = vmatpush1.msra.mxu0 0.0
    %1666 = vmatprep.subr.mxu0 0.0
    %1667 = vmatpush1.msra.mxu0 0.0
    %1668 = vmatprep.mubr.f32.mxu0 0.0
    %1669 = vmatmul.mubr.f32.gmra.mrb[0].mxu0 %v1602
    %v1670 = vpop.f32.mrb[0].mxu0
    %v1671 = vadd.f32 %v944, %v1670
    %v1672 = vpop.f32.mrb[0].mxu0
    %1673 = vdwg.mxu0
    %v1674 = vmul.f32 %v1671, 2.0
    %v1675 = vsel %vm155, %v1674, %v1671
    %v1676 = vxor.u32 %v1675, 2147483648
    %v1677 = vmul.f32 %v1676, 1.442695
    %v1678 = vpow.pop %v1677
    %v1679 = vadd.f32 %v1678, 1.0
    %v1680 = vrcp.pop %v1679
    %v1681 = vmul.f32 1.0, %v1680
    %v1682 = vmul.f32 %v1681, 2.0
    %v1683 = vsub.f32 %v1682, 1.0
    %v1684 = vsel %vm155, %v1683, %v1681
    %v1685 = vmul.f32 %v1684, %v1586
    %1687 = vrot.lane.b32.xlu0 %v1684, 64
    %v1688 = vpop.permute.xlu0 %1687
    %v1690 = vmul.f32 %v1684, %v1688
    %1692 = vrot.lane.b32.xlu0 %v1690, 32
    %v1693 = vpop.permute.xlu0 %1692
    %v1695 = vadd.f32 %v1685, %v1693
    %v1696 = vtanh.pop %v1695
    %1698 = vrot.lane.b32.xlu0 %v1696, 64
    %v1699 = vpop.permute.xlu0 %1698
    %v1701 = vmul.f32 %v1684, %v1699
    %1703 = vrot.lane.b32.xlu0 %v925, 32
    %v1704 = vpop.permute.xlu0 %1703
    %1707 = vrot.lane.b32.xlu0 %v1701, 64
    %v1708 = vpop.permute.xlu0 %1707
    %v1710 = vsel %vm938, %v1704, %v1708
    %v1712 = vsel %vm946, %v1710, 0
    %1714 = vmatprep.subr.mxu0 0.0
    %1715 = vmatpush1.msra.mxu0 %v926
    %1716 = vmatprep.subr.mxu0 0.0
    %1717 = vmatpush1.msra.mxu0 %v927
    %1718 = vmatprep.subr.mxu0 0.0
    %1719 = vmatpush1.msra.mxu0 %v928
    %1720 = vmatprep.subr.mxu0 0.0
    %1721 = vmatpush1.msra.mxu0 %v929
    %1722 = vmatprep.subr.mxu0 0.0
    %1723 = vmatpush1.msra.mxu0 %v930
    %1724 = vmatprep.subr.mxu0 0.0
    %1725 = vmatpush1.msra.mxu0 %v931
    %1726 = vmatprep.subr.mxu0 0.0
    %1727 = vmatpush1.msra.mxu0 %v932
    %1728 = vmatprep.subr.mxu0 0.0
    %1729 = vmatpush1.msra.mxu0 %v933
    %1730 = vmatprep.subr.mxu0 0.0
    %1731 = vmatpush1.msra.mxu0 0.0
    %1732 = vmatprep.subr.mxu0 0.0
    %1733 = vmatpush1.msra.mxu0 0.0
    %1734 = vmatprep.subr.mxu0 0.0
    %1735 = vmatpush1.msra.mxu0 0.0
    %1736 = vmatprep.subr.mxu0 0.0
    %1737 = vmatpush1.msra.mxu0 0.0
    %1738 = vmatprep.subr.mxu0 0.0
    %1739 = vmatpush1.msra.mxu0 0.0
    %1740 = vmatprep.subr.mxu0 0.0
    %1741 = vmatpush1.msra.mxu0 0.0
    %1742 = vmatprep.subr.mxu0 0.0
    %1743 = vmatpush1.msra.mxu0 0.0
    %1744 = vmatprep.subr.mxu0 0.0
    %1745 = vmatpush1.msra.mxu0 0.0
    %1746 = vmatprep.subr.mxu0 0.0
    %1747 = vmatpush1.msra.mxu0 0.0
    %1748 = vmatprep.subr.mxu0 0.0
    %1749 = vmatpush1.msra.mxu0 0.0
    %1750 = vmatprep.subr.mxu0 0.0
    %1751 = vmatpush1.msra.mxu0 0.0
    %1752 = vmatprep.subr.mxu0 0.0
    %1753 = vmatpush1.msra.mxu0 0.0
    %1754 = vmatprep.subr.mxu0 0.0
    %1755 = vmatpush1.msra.mxu0 0.0
    %1756 = vmatprep.subr.mxu0 0.0
    %1757 = vmatpush1.msra.mxu0 0.0
    %1758 = vmatprep.subr.mxu0 0.0
    %1759 = vmatpush1.msra.mxu0 0.0
    %1760 = vmatprep.subr.mxu0 0.0
    %1761 = vmatpush1.msra.mxu0 0.0
    %1762 = vmatprep.subr.mxu0 0.0
    %1763 = vmatpush1.msra.mxu0 0.0
    %1764 = vmatprep.subr.mxu0 0.0
    %1765 = vmatpush1.msra.mxu0 0.0
    %1766 = vmatprep.subr.mxu0 0.0
    %1767 = vmatpush1.msra.mxu0 0.0
    %1768 = vmatprep.subr.mxu0 0.0
    %1769 = vmatpush1.msra.mxu0 0.0
    %1770 = vmatprep.subr.mxu0 0.0
    %1771 = vmatpush1.msra.mxu0 0.0
    %1772 = vmatprep.subr.mxu0 0.0
    %1773 = vmatpush1.msra.mxu0 0.0
    %1774 = vmatprep.subr.mxu0 0.0
    %1775 = vmatpush1.msra.mxu0 0.0
    %1776 = vmatprep.subr.mxu0 0.0
    %1777 = vmatpush1.msra.mxu0 0.0
    %1778 = vmatprep.mubr.f32.mxu0 0.0
    %1779 = vmatmul.mubr.f32.gmra.mrb[0].mxu0 %v1712
    %v1780 = vpop.f32.mrb[0].mxu0
    %v1781 = vadd.f32 %v944, %v1780
    %v1782 = vpop.f32.mrb[0].mxu0
    %1783 = vdwg.mxu0
    %v1784 = vmul.f32 %v1781, 2.0
    %v1785 = vsel %vm155, %v1784, %v1781
    %v1786 = vxor.u32 %v1785, 2147483648
    %v1787 = vmul.f32 %v1786, 1.442695
    %v1788 = vpow.pop %v1787
    %v1789 = vadd.f32 %v1788, 1.0
    %v1790 = vrcp.pop %v1789
    %v1791 = vmul.f32 1.0, %v1790
    %v1792 = vmul.f32 %v1791, 2.0
    %v1793 = vsub.f32 %v1792, 1.0
    %v1794 = vsel %vm155, %v1793, %v1791
    %v1795 = vmul.f32 %v1794, %v1695
    %1797 = vrot.lane.b32.xlu0 %v1794, 64
    %v1798 = vpop.permute.xlu0 %1797
    %v1800 = vmul.f32 %v1794, %v1798
    %1802 = vrot.lane.b32.xlu0 %v1800, 32
    %v1803 = vpop.permute.xlu0 %1802
    %v1805 = vadd.f32 %v1795, %v1803
    %v1806 = vtanh.pop %v1805
    %1808 = vrot.lane.b32.xlu0 %v1806, 64
    %v1809 = vpop.permute.xlu0 %1808
    %v1811 = vmul.f32 %v1794, %v1809
    %v1813 = vrot.slane %v1811, 7
    %1814 = vrot.lane.b32.xlu0 %v1813, 32
    %v1815 = vpop.permute.xlu0 %1814
    %vm1817 = vcmask 1040384
    %v1818 = vsel %vm1817, 0.0, %v1815
    %v1819 = vsel %vm1817, %v1815, 0.0
    %vm1822 = vcmask 1046528
    %v1823 = vrot.slane %v1818, 1
    %v1824 = vrot.slane %v1819, 1
    %v1825 = vsel %vm1822, %v1823, %v1824
    %1826 = vrot.lane.b32.xlu0 %v1825, 32
    %v1827 = vpop.permute.xlu0 %1826
    %vm1829 = vcmask 1045504
    %v1830 = vrot.slane %v1818, 2
    %v1831 = vrot.slane %v1819, 2
    %v1832 = vsel %vm1829, %v1830, %v1831
    %1833 = vrot.lane.b32.xlu0 %v1832, 64
    %v1834 = vpop.permute.xlu0 %1833
    %v1836 = vsel %vm938, %v1818, %v1827
    %v1837 = vsel %vm946, %v1836, %v1834
    %v1838 = vld [vmem:[%s5] sm:$0xff]
    %v1839 = vld [vmem:[%s5 + $0x8] sm:$0xff]
    %v1840 = vld [vmem:[%s5 + $0x10] sm:$0xff]
    %v1841 = vld [vmem:[%s5 + $0x18] sm:$0xff]
    %v1842 = vld [vmem:[%s5 + $0x20] sm:$0xff]
    %v1843 = vld [vmem:[%s5 + $0x28] sm:$0xff]
    %v1844 = vld [vmem:[%s5 + $0x30] sm:$0xff]
    %v1845 = vld [vmem:[%s5 + $0x38] sm:$0xff]
    %v1846 = vld [vmem:[%s5 + $0x40] sm:$0xff]
    %v1847 = vld [vmem:[%s5 + $0x48] sm:$0xff]
    %v1848 = vld [vmem:[%s5 + $0x50] sm:$0xff]
    %v1849 = vld [vmem:[%s5 + $0x58] sm:$0xff]
    %v1850 = vld [vmem:[%s6] sm:$0x1]
    %v1852 = vlaneseq
    %v1853 = vshrl.u32 %v1852, 7
    %v1854 = vsub.s32 0, %v1853
    %v1855 = vrot.slane %v1850, %v1854
    %vm1857 = vcmask 785408
    %v1859 = vsel %vm1857, %v1837, 0
    %1861 = vmatprep.subr.mxu0 0.0
    %1862 = vmatpush1.msra.mxu0 %v1838
    %1863 = vmatprep.subr.mxu0 0.0
    %1864 = vmatpush1.msra.mxu0 %v1839
    %1865 = vmatprep.subr.mxu0 0.0
    %1866 = vmatpush1.msra.mxu0 %v1840
    %1867 = vmatprep.subr.mxu0 0.0
    %1868 = vmatpush1.msra.mxu0 %v1841
    %1869 = vmatprep.subr.mxu0 0.0
    %1870 = vmatpush1.msra.mxu0 %v1842
    %1871 = vmatprep.subr.mxu0 0.0
    %1872 = vmatpush1.msra.mxu0 %v1843
    %1873 = vmatprep.subr.mxu0 0.0
    %1874 = vmatpush1.msra.mxu0 %v1844
    %1875 = vmatprep.subr.mxu0 0.0
    %1876 = vmatpush1.msra.mxu0 %v1845
    %1877 = vmatprep.subr.mxu0 0.0
    %1878 = vmatpush1.msra.mxu0 %v1846
    %1879 = vmatprep.subr.mxu0 0.0
    %1880 = vmatpush1.msra.mxu0 %v1847
    %1881 = vmatprep.subr.mxu0 0.0
    %1882 = vmatpush1.msra.mxu0 %v1848
    %1883 = vmatprep.subr.mxu0 0.0
    %1884 = vmatpush1.msra.mxu0 %v1849
    %1885 = vmatprep.subr.mxu0 0.0
    %1886 = vmatpush1.msra.mxu0 0.0
    %1887 = vmatprep.subr.mxu0 0.0
    %1888 = vmatpush1.msra.mxu0 0.0
    %1889 = vmatprep.subr.mxu0 0.0
    %1890 = vmatpush1.msra.mxu0 0.0
    %1891 = vmatprep.subr.mxu0 0.0
    %1892 = vmatpush1.msra.mxu0 0.0
    %1893 = vmatprep.subr.mxu0 0.0
    %1894 = vmatpush1.msra.mxu0 0.0
    %1895 = vmatprep.subr.mxu0 0.0
    %1896 = vmatpush1.msra.mxu0 0.0
    %1897 = vmatprep.subr.mxu0 0.0
    %1898 = vmatpush1.msra.mxu0 0.0
    %1899 = vmatprep.subr.mxu0 0.0
    %1900 = vmatpush1.msra.mxu0 0.0
    %1901 = vmatprep.subr.mxu0 0.0
    %1902 = vmatpush1.msra.mxu0 0.0
    %1903 = vmatprep.subr.mxu0 0.0
    %1904 = vmatpush1.msra.mxu0 0.0
    %1905 = vmatprep.subr.mxu0 0.0
    %1906 = vmatpush1.msra.mxu0 0.0
    %1907 = vmatprep.subr.mxu0 0.0
    %1908 = vmatpush1.msra.mxu0 0.0
    %1909 = vmatprep.subr.mxu0 0.0
    %1910 = vmatpush1.msra.mxu0 0.0
    %1911 = vmatprep.subr.mxu0 0.0
    %1912 = vmatpush1.msra.mxu0 0.0
    %1913 = vmatprep.subr.mxu0 0.0
    %1914 = vmatpush1.msra.mxu0 0.0
    %1915 = vmatprep.subr.mxu0 0.0
    %1916 = vmatpush1.msra.mxu0 0.0
    %1917 = vmatprep.subr.mxu0 0.0
    %1918 = vmatpush1.msra.mxu0 0.0
    %1919 = vmatprep.subr.mxu0 0.0
    %1920 = vmatpush1.msra.mxu0 0.0
    %1921 = vmatprep.subr.mxu0 0.0
    %1922 = vmatpush1.msra.mxu0 0.0
    %1923 = vmatprep.subr.mxu0 0.0
    %1924 = vmatpush1.msra.mxu0 0.0
    %1925 = vmatprep.mubr.f32.mxu0 0.0
    %1926 = vmatmul.mubr.f32.gmra.mrb[0].mxu0 %v1859
    %v1927 = vpop.f32.mrb[0].mxu0
    %v1928 = vadd.f32 %v1855, %v1927
    %v1929 = vpop.f32.mrb[0].mxu0
    %1930 = vdwg.mxu0
    %v1931 = vld [vmem:[%s7] sm:$0xff]
    %v1932 = vld [vmem:[%s7 + $0x8] sm:$0xff]
    %v1933 = vld [vmem:[%s7 + $0x10] sm:$0xff]
    %v1934 = vld [vmem:[%s7 + $0x18] sm:$0xff]
    %v1935 = vld [vmem:[%s8] sm:$0x1]
    %v1937 = vlaneseq
    %v1938 = vshrl.u32 %v1937, 7
    %v1939 = vsub.s32 0, %v1938
    %v1940 = vrot.slane %v1935, %v1939
    %v1943 = vsel %vm938, %v1928, 0
    %1945 = vmatprep.subr.mxu0 0.0
    %1946 = vmatpush1.msra.mxu0 %v1931
    %1947 = vmatprep.subr.mxu0 0.0
    %1948 = vmatpush1.msra.mxu0 %v1932
    %1949 = vmatprep.subr.mxu0 0.0
    %1950 = vmatpush1.msra.mxu0 %v1933
    %1951 = vmatprep.subr.mxu0 0.0
    %1952 = vmatpush1.msra.mxu0 %v1934
    %1953 = vmatprep.subr.mxu0 0.0
    %1954 = vmatpush1.msra.mxu0 0.0
    %1955 = vmatprep.subr.mxu0 0.0
    %1956 = vmatpush1.msra.mxu0 0.0
    %1957 = vmatprep.subr.mxu0 0.0
    %1958 = vmatpush1.msra.mxu0 0.0
    %1959 = vmatprep.subr.mxu0 0.0
    %1960 = vmatpush1.msra.mxu0 0.0
    %1961 = vmatprep.subr.mxu0 0.0
    %1962 = vmatpush1.msra.mxu0 0.0
    %1963 = vmatprep.subr.mxu0 0.0
    %1964 = vmatpush1.msra.mxu0 0.0
    %1965 = vmatprep.subr.mxu0 0.0
    %1966 = vmatpush1.msra.mxu0 0.0
    %1967 = vmatprep.subr.mxu0 0.0
    %1968 = vmatpush1.msra.mxu0 0.0
    %1969 = vmatprep.subr.mxu0 0.0
    %1970 = vmatpush1.msra.mxu0 0.0
    %1971 = vmatprep.subr.mxu0 0.0
    %1972 = vmatpush1.msra.mxu0 0.0
    %1973 = vmatprep.subr.mxu0 0.0
    %1974 = vmatpush1.msra.mxu0 0.0
    %1975 = vmatprep.subr.mxu0 0.0
    %1976 = vmatpush1.msra.mxu0 0.0
    %1977 = vmatprep.subr.mxu0 0.0
    %1978 = vmatpush1.msra.mxu0 0.0
    %1979 = vmatprep.subr.mxu0 0.0
    %1980 = vmatpush1.msra.mxu0 0.0
    %1981 = vmatprep.subr.mxu0 0.0
    %1982 = vmatpush1.msra.mxu0 0.0
    %1983 = vmatprep.subr.mxu0 0.0
    %1984 = vmatpush1.msra.mxu0 0.0
    %1985 = vmatprep.subr.mxu0 0.0
    %1986 = vmatpush1.msra.mxu0 0.0
    %1987 = vmatprep.subr.mxu0 0.0
    %1988 = vmatpush1.msra.mxu0 0.0
    %1989 = vmatprep.subr.mxu0 0.0
    %1990 = vmatpush1.msra.mxu0 0.0
    %1991 = vmatprep.subr.mxu0 0.0
    %1992 = vmatpush1.msra.mxu0 0.0
    %1993 = vmatprep.subr.mxu0 0.0
    %1994 = vmatpush1.msra.mxu0 0.0
    %1995 = vmatprep.subr.mxu0 0.0
    %1996 = vmatpush1.msra.mxu0 0.0
    %1997 = vmatprep.subr.mxu0 0.0
    %1998 = vmatpush1.msra.mxu0 0.0
    %1999 = vmatprep.subr.mxu0 0.0
    %2000 = vmatpush1.msra.mxu0 0.0
    %2001 = vmatprep.subr.mxu0 0.0
    %2002 = vmatpush1.msra.mxu0 0.0
    %2003 = vmatprep.subr.mxu0 0.0
    %2004 = vmatpush1.msra.mxu0 0.0
    %2005 = vmatprep.subr.mxu0 0.0
    %2006 = vmatpush1.msra.mxu0 0.0
    %2007 = vmatprep.subr.mxu0 0.0
    %2008 = vmatpush1.msra.mxu0 0.0
    %2009 = vmatprep.mubr.f32.mxu0 0.0
    %2010 = vmatmul.mubr.f32.gmra.mrb[0].mxu0 %v1943
    %v2011 = vpop.f32.mrb[0].mxu0
    %v2012 = vadd.f32 %v1940, %v2011
    %v2013 = vpop.f32.mrb[0].mxu0
    %2014 = vdwg.mxu0
    %vm2015 = vcmask 64512
    %2016 = vst.msk [vmem:[#allocation5] sm:$0xff] %vm2015, %v2012
    // Predicated region
    $region42: #{tpu_custom_call.1} parent=1 // pred_check
      _
    $region43: #{tpu_custom_call.1} parent=1 // pred_check_branch
      %2018 = sbr.rel (0) target = $region45
    $region44: #{tpu_custom_call.1} parent=1 // pred_region
      %s2020 = ssub.s32 128, 128
      %2021 = vsyncadd [#allocation4], %s2020
      %s2023 = sshll.u32 [#allocation5], 4
      %s2024 = int_to_ptr.vmem [resolvable:$true] %s2023
      %2026 = dma.vmem_to_hbm [thread:$0]  %s2024, 128, %s9, [#allocation4]
    $region45: #{tpu_custom_call.1} parent=1 // pred_fallthru
      _
    // Predicated region
    $region46: #{tpu_custom_call.1} parent=1 // pred_check
      _
    $region47: #{tpu_custom_call.1} parent=1 // pred_check_branch
      %2028 = sbr.rel (0) target = $region49
    $region48: #{tpu_custom_call.1} parent=1 // pred_region
      %2029 = dma.done [#allocation4], 128
    $region49: #{tpu_custom_call.1} parent=1 // pred_fallthru
      _
    %2030 = vsyncpa [#allocation3], 1
    %2031 = vsyncpa [#allocation4], 1

</llo_original>
